<compile_context>
chip_gen: v6e
topology: v6e:2x2x1
jax: 0.10.0
libtpu: 0.0.40
codegen_flags: <defaults>
</compile_context>

<pallas_src>
import functools

import jax
import jax.numpy as jnp
from jax.experimental import pallas as pl
from jax.experimental.pallas import tpu as pltpu


def _semantic_attention_kernel(h_ref, w1t_ref, w2_ref, out_ref, attn_ref):
    # h_ref  : (R, TB, D)  -- natural layout, no wrapper transpose
    # w1t_ref: (R, A, D)   -- W1 with (D, A) swapped, resident across the grid
    # w2_ref : (R, A)      -- W2 with out_dim == 1 squeezed, resident
    h = h_ref[...]
    w1t = w1t_ref[...]
    w2 = w2_ref[...]

    # z[r, a, b] = tanh( sum_d W1[r, d, a] * h[r, b, d] )   -> (R, A, TB)
    # Batched MXU contraction over the minor dims of both operands (same form
    # as flash attention's 'bqd,bkd->bqk'); keeps the batch tile on the lanes
    # so the EUP tanh runs on fully-populated vregs.
    z = jnp.tanh(
        jnp.einsum("rad,rbd->rab", w1t, h, preferred_element_type=jnp.float32)
    )

    # scores[r, b] = sum_a z[r, a, b] * W2[r, a]            -> (R, TB)
    scores = jnp.sum(z * w2[:, :, None], axis=1)

    # Numerically stable softmax over the relation axis (dim=0 in PyTorch).
    m = jnp.max(scores, axis=0, keepdims=True)
    e = jnp.exp(scores - m)
    attn = e * pl.reciprocal(jnp.sum(e, axis=0, keepdims=True), approx=False)
    attn_ref[...] = attn

    # out[b, d] = sum_r attn[r, b] * h[r, b, d].
    # attn lives lane-dense as (R, TB); a tiny (R, TB) -> (TB, R) transpose
    # puts it on the sublane axis so it broadcasts along D.  Unrolled over the
    # small static R, so no (R, TB, D) broadcast temporary is materialized.
    attn_t = attn.T                                     # (TB, R)
    num_relations = h.shape[0]
    acc = attn_t[:, 0:1] * h[0]                         # (TB, D)
    for r in range(1, num_relations):
        acc = acc + attn_t[:, r:r + 1] * h[r]
    out_ref[...] = acc


def _auto_tile(batch, num_relations, in_dim):
    """Batch tile (lane axis of the intermediates) from a byte budget."""
    bytes_per_col = num_relations * in_dim * 4          # f32 h bytes per batch column
    # Tiny problems: one block, one grid step (per-step overhead dominates).
    if batch * bytes_per_col <= (2 << 20):
        return batch
    # Target ~4 MiB of h per grid step, lane-aligned, capped (v7x-safe).
    tb = min(8192, max(128, ((4 << 20) // bytes_per_col) // 128 * 128))
    # Keep >= 4 grid steps so v7x's two TensorCores each get >= 2 pipelined
    # steps under dimension_semantics=("parallel",).
    while tb > 128 and pl.cdiv(batch, tb) < 4:
        tb = max(128, ((tb // 2) // 128) * 128)
    return tb


def _vmem_limit_bytes(num_relations, in_dim, dim_a, tb):
    """Explicit VMEM budget: double-buffered h / out / attn tiles + resident
    weights + live intermediates, clamped to a per-generation ceiling."""
    f32 = 4
    h_tile = num_relations * tb * in_dim * f32
    out_tiles = (tb * in_dim + num_relations * tb) * f32
    weights = (num_relations * dim_a * in_dim + num_relations * dim_a) * f32
    live = (num_relations * dim_a * tb            # z
            + 8 * num_relations * tb              # softmax temporaries, attn, attn_t
            + 2 * tb * in_dim) * f32              # accumulator
    need = 2 * (h_tile + out_tiles + weights) + live
    try:
        physical = int(pltpu.get_tpu_info().vmem_capacity_bytes)
    except Exception:
        physical = 64 << 20                       # conservative (v7x per-core)
    # Leave headroom for compiler-internal scratch (~25%), cap well below 128 MiB.
    ceiling = min((physical * 3) // 4, 112 << 20)
    return int(min(max(2 * need, 32 << 20), ceiling))


@functools.partial(jax.jit, static_argnames=("tb",))
def semantic_attention_einsum(h, w1, w2, tb=None):
    """h: (R, B, D); w1: (R, D, A); w2: (R, A, 1).  Returns (out (B, D), attn (R, B))."""
    R, B, D = h.shape
    A = w1.shape[-1]
    if tb is None:
        tb = _auto_tile(B, R, D)
    grid = (pl.cdiv(B, tb),)

    # Weight relayout only (tiny tensors); h itself stays in natural layout —
    # no extra HBM pass over the dominant stream.
    w1t = jnp.swapaxes(w1, 1, 2)            # (R, A, D)
    w2s = w2[..., 0]                        # (R, A), out_dim == 1 squeezed

    out, attn = pl.pallas_call(
        _semantic_attention_kernel,
        out_shape=(
            jax.ShapeDtypeStruct((B, D), jnp.float32),
            jax.ShapeDtypeStruct((R, B), jnp.float32),
        ),
        grid_spec=pltpu.PrefetchScalarGridSpec(
            num_scalar_prefetch=0,
            grid=grid,
            in_specs=[
                pl.BlockSpec((R, tb, D), lambda i: (0, i, 0)),   # h tile (natural layout)
                pl.BlockSpec((R, A, D), lambda i: (0, 0, 0)),    # W1^T (resident)
                pl.BlockSpec((R, A), lambda i: (0, 0)),          # W2 (resident)
            ],
            out_specs=[
                pl.BlockSpec((tb, D), lambda i: (i, 0)),         # fused features (B, D)
                pl.BlockSpec((R, tb), lambda i: (0, i)),         # attention (R, B)
            ],
        ),
        compiler_params=pltpu.CompilerParams(
            dimension_semantics=("parallel",),
            vmem_limit_bytes=_vmem_limit_bytes(R, D, A, tb),
        ),
    )(h, w1t, w2s)

    # dropout(p=0.0) is the identity, so the outputs are returned as-is.
    return out, attn


def _xavier_uniform(key, shape, gain):
    # PyTorch xavier_uniform_ on a 3-D tensor (R, fan_in-ish, fan_out-ish):
    # fan_in = shape[1] * prod(shape[2:]), fan_out = shape[0] * prod(shape[2:]).
    recep = 1
    for s in shape[2:]:
        recep *= s
    fan_in = shape[1] * recep
    fan_out = shape[0] * recep
    bound = gain * (6.0 / (fan_in + fan_out)) ** 0.5
    return jax.random.uniform(key, shape, jnp.float32, -bound, bound)


def _reference(h, w1, w2):
    scores = jnp.einsum("rba,rao->rbo", jnp.tanh(jnp.einsum("rbd,rda->rba", h, w1)), w2)
    attn = jax.nn.softmax(scores, axis=0)[..., 0]          # squeeze out_dim == 1
    out = jnp.einsum("rb,rbd->bd", attn, h)
    return out, attn


if __name__ == "__main__":
    # Small, module-consistent shapes.
    num_relations, batch, in_dim, dim_a, out_dim = 4, 256, 32, 16, 1

    key = jax.random.PRNGKey(0)
    k_h, k_w1, k_w2 = jax.random.split(key, 3)

    h = jax.random.normal(k_h, (num_relations, batch, in_dim), jnp.float32)
    gain_tanh = 5.0 / 3.0  # nn.init.calculate_gain('tanh')
    w1 = _xavier_uniform(k_w1, (num_relations, in_dim, dim_a), gain_tanh)
    w2 = _xavier_uniform(k_w2, (num_relations, dim_a, out_dim), 1.0)

    out, attn = semantic_attention_einsum(h, w1, w2)   # tiny problem -> grid=1, tb=256
    jax.block_until_ready((out, attn))

    # dropout(p=0.0) is the identity, so the reference omits it.
    ref_out, ref_attn = _reference(h, w1, w2)
    assert jnp.allclose(out, ref_out, atol=1e-5, rtol=1e-5)
    assert jnp.allclose(attn, ref_attn, atol=1e-5, rtol=1e-5)

    print("KERNEL_OK")
</pallas_src>

<mosaic_0001>
module attributes {stable_mosaic.version = 11 : i64} {
  func.func @_semantic_attention_kernel(%arg0: i32, %arg1: memref<4x256x32xf32, #tpu.memory_space<vmem>>, %arg2: memref<4x16x32xf32, #tpu.memory_space<vmem>>, %arg3: memref<4x16xf32, #tpu.memory_space<vmem>>, %arg4: memref<256x32xf32, #tpu.memory_space<vmem>>, %arg5: memref<4x256xf32, #tpu.memory_space<vmem>>) attributes {dimension_semantics = [#tpu.dimension_semantics<parallel>], iteration_bounds = array<i64: 1>, scalar_prefetch = 0 : i64, scratch_operands = 0 : i64, tpu.core_type = #tpu.core_type<tc>, window_params = [{transform_indices = @transform_0, window_bounds = array<i64: 4, 256, 32>}, {pipeline_mode = #tpu.pipeline_mode<synchronous>, transform_indices = @transform_1, window_bounds = array<i64: 4, 16, 32>}, {pipeline_mode = #tpu.pipeline_mode<synchronous>, transform_indices = @transform_2, window_bounds = array<i64: 4, 16>}, {transform_indices = @transform_3, window_bounds = array<i64: 256, 32>}, {transform_indices = @transform_4, window_bounds = array<i64: 4, 256>}]} {
    %c0 = arith.constant 0 : index
    %c0_0 = arith.constant 0 : index
    %c0_1 = arith.constant 0 : index
    %0 = vector.load %arg1[%c0, %c0_0, %c0_1] : memref<4x256x32xf32, #tpu.memory_space<vmem>>, vector<4x256x32xf32>
    %c0_2 = arith.constant 0 : index
    %c0_3 = arith.constant 0 : index
    %c0_4 = arith.constant 0 : index
    %1 = vector.load %arg2[%c0_2, %c0_3, %c0_4] : memref<4x16x32xf32, #tpu.memory_space<vmem>>, vector<4x16x32xf32>
    %c0_5 = arith.constant 0 : index
    %c0_6 = arith.constant 0 : index
    %2 = vector.load %arg3[%c0_5, %c0_6] : memref<4x16xf32, #tpu.memory_space<vmem>>, vector<4x16xf32>
    "tpu.trace_start"() <{level = 10 : i32, message = "rad,rbd->rab"}> : () -> ()
    %cst = arith.constant dense<0.000000e+00> : vector<4x16x256xf32>
    %3 = tpu.matmul %1, %0, %cst {dimension_numbers = #tpu.dot_dimension_numbers<[2], [2], [1], [1], [0, 0, 0, 1, 1, 1], [0], [0]>} : vector<4x16x32xf32>, vector<4x256x32xf32>, vector<4x16x256xf32> -> vector<4x16x256xf32>
    "tpu.trace_stop"() : () -> ()
    %4 = math.tanh %3 : vector<4x16x256xf32>
    %5 = vector.shape_cast %2 : vector<4x16xf32> to vector<4x16x1xf32>
    %6 = vector.broadcast %5 : vector<4x16x1xf32> to vector<4x16x256xf32>
    %7 = arith.mulf %4, %6 : vector<4x16x256xf32>
    %cst_7 = arith.constant dense<0.000000e+00> : vector<4x256xf32>
    %8 = vector.multi_reduction <add>, %7, %cst_7 [1] : vector<4x16x256xf32> to vector<4x256xf32>
    %cst_8 = arith.constant dense<0xFF800000> : vector<256xf32>
    %9 = vector.multi_reduction <maximumf>, %8, %cst_8 [0] : vector<4x256xf32> to vector<256xf32>
    %10 = vector.shape_cast %9 : vector<256xf32> to vector<1x256xf32>
    %11 = vector.broadcast %10 : vector<1x256xf32> to vector<4x256xf32>
    %12 = arith.subf %8, %11 : vector<4x256xf32>
    %13 = math.exp %12 : vector<4x256xf32>
    %cst_9 = arith.constant dense<0.000000e+00> : vector<256xf32>
    %14 = vector.multi_reduction <add>, %13, %cst_9 [0] : vector<4x256xf32> to vector<256xf32>
    %15 = vector.shape_cast %14 : vector<256xf32> to vector<1x256xf32>
    %16 = tpu.reciprocal %15 : vector<1x256xf32> -> vector<1x256xf32>
    %17 = vector.broadcast %16 : vector<1x256xf32> to vector<4x256xf32>
    %18 = arith.mulf %13, %17 : vector<4x256xf32>
    %c0_10 = arith.constant 0 : index
    %c0_11 = arith.constant 0 : index
    %19 = vector.load %arg5[%c0_10, %c0_11] : memref<4x256xf32, #tpu.memory_space<vmem>>, vector<4x256xf32>
    tpu.vector_store %arg5[%c0_10, %c0_11], %18 {strides = array<i32>} : memref<4x256xf32, #tpu.memory_space<vmem>>, vector<4x256xf32>,
    %20 = tpu.transpose %18, [1, 0] : vector<4x256xf32> -> vector<256x4xf32>
    %21 = vector.extract_strided_slice %20 {offsets = [0, 0], sizes = [256, 1], strides = [1, 1]} : vector<256x4xf32> to vector<256x1xf32>
    %22 = vector.extract_strided_slice %0 {offsets = [0, 0, 0], sizes = [1, 256, 32], strides = [1, 1, 1]} : vector<4x256x32xf32> to vector<1x256x32xf32>
    %23 = vector.shape_cast %22 : vector<1x256x32xf32> to vector<256x32xf32>
    %24 = vector.broadcast %21 : vector<256x1xf32> to vector<256x32xf32>
    %25 = arith.mulf %24, %23 : vector<256x32xf32>
    %26 = vector.extract_strided_slice %20 {offsets = [0, 1], sizes = [256, 1], strides = [1, 1]} : vector<256x4xf32> to vector<256x1xf32>
    %27 = vector.extract_strided_slice %0 {offsets = [1, 0, 0], sizes = [1, 256, 32], strides = [1, 1, 1]} : vector<4x256x32xf32> to vector<1x256x32xf32>
    %28 = vector.shape_cast %27 : vector<1x256x32xf32> to vector<256x32xf32>
    %29 = vector.broadcast %26 : vector<256x1xf32> to vector<256x32xf32>
    %30 = arith.mulf %29, %28 : vector<256x32xf32>
    %31 = arith.addf %25, %30 : vector<256x32xf32>
    %32 = vector.extract_strided_slice %20 {offsets = [0, 2], sizes = [256, 1], strides = [1, 1]} : vector<256x4xf32> to vector<256x1xf32>
    %33 = vector.extract_strided_slice %0 {offsets = [2, 0, 0], sizes = [1, 256, 32], strides = [1, 1, 1]} : vector<4x256x32xf32> to vector<1x256x32xf32>
    %34 = vector.shape_cast %33 : vector<1x256x32xf32> to vector<256x32xf32>
    %35 = vector.broadcast %32 : vector<256x1xf32> to vector<256x32xf32>
    %36 = arith.mulf %35, %34 : vector<256x32xf32>
    %37 = arith.addf %31, %36 : vector<256x32xf32>
    %38 = vector.extract_strided_slice %20 {offsets = [0, 3], sizes = [256, 1], strides = [1, 1]} : vector<256x4xf32> to vector<256x1xf32>
    %39 = vector.extract_strided_slice %0 {offsets = [3, 0, 0], sizes = [1, 256, 32], strides = [1, 1, 1]} : vector<4x256x32xf32> to vector<1x256x32xf32>
    %40 = vector.shape_cast %39 : vector<1x256x32xf32> to vector<256x32xf32>
    %41 = vector.broadcast %38 : vector<256x1xf32> to vector<256x32xf32>
    %42 = arith.mulf %41, %40 : vector<256x32xf32>
    %43 = arith.addf %37, %42 : vector<256x32xf32>
    %c0_12 = arith.constant 0 : index
    %c0_13 = arith.constant 0 : index
    %44 = vector.load %arg4[%c0_12, %c0_13] : memref<256x32xf32, #tpu.memory_space<vmem>>, vector<256x32xf32>
    tpu.vector_store %arg4[%c0_12, %c0_13], %43 {strides = array<i32>} : memref<256x32xf32, #tpu.memory_space<vmem>>, vector<256x32xf32>,
    return
  }
  func.func @transform_0(%arg0: i32) -> (i32, i32, i32) {
    %c0_i32 = arith.constant 0 : i32
    %c0_i32_0 = arith.constant 0 : i32
    %c0_i32_1 = arith.constant 0 : i32
    return %c0_i32, %arg0, %c0_i32_0 : i32, i32, i32
  }
  func.func @transform_1(%arg0: i32) -> (i32, i32, i32) {
    %c0_i32 = arith.constant 0 : i32
    %c0_i32_0 = arith.constant 0 : i32
    %c0_i32_1 = arith.constant 0 : i32
    %c0_i32_2 = arith.constant 0 : i32
    return %c0_i32, %c0_i32_0, %c0_i32_1 : i32, i32, i32
  }
  func.func @transform_2(%arg0: i32) -> (i32, i32) {
    %c0_i32 = arith.constant 0 : i32
    %c0_i32_0 = arith.constant 0 : i32
    %c0_i32_1 = arith.constant 0 : i32
    return %c0_i32, %c0_i32_0 : i32, i32
  }
  func.func @transform_3(%arg0: i32) -> (i32, i32) {
    %c0_i32 = arith.constant 0 : i32
    %c0_i32_0 = arith.constant 0 : i32
    return %arg0, %c0_i32 : i32, i32
  }
  func.func @transform_4(%arg0: i32) -> (i32, i32) {
    %c0_i32 = arith.constant 0 : i32
    %c0_i32_0 = arith.constant 0 : i32
    return %c0_i32, %arg0 : i32, i32
  }
}

</mosaic_0001>

<llo_original>
// kernel: semantic_attention_einsum.1
$region0: #{semantic_attention_einsum.1}
  #allocation0 [shape = 'u32[]', space=smem, size = 0x4, offset = 0x4, fixed_abs, tag = 'smem constant byte address 0x4 - core index']
  #allocation1 [shape = 'u32[144,128]{1,0:T(1,128)}', space=vmem, size = 0x12000, scoped, tag = 'internal scratch']
  %s0 = inlined_call_operand.vmem [shape: f32[4,256,32], index: 0, kind: input, shape index: {}]
  %s1 = inlined_call_operand.vmem [shape: f32[4,16,32], index: 1, kind: input, shape index: {}]
  %s2 = inlined_call_operand.vmem [shape: f32[4,16], index: 2, kind: input, shape index: {}]
  %s3 = inlined_call_operand.vmem [shape: f32[256,32], index: 3, kind: output, shape index: {0}]
  %s4 = inlined_call_operand.hbm [shape: f32[4,256], index: 4, kind: output, shape index: {1}]
  %5 = xla_tuple %s3, %s4
  %s6 = sld [smem:[#allocation0]]
  $region30: #{semantic_attention_einsum.1} parent=0
    _
  %s8 = ssub.s32 1, %s6
  %s9 = scalar_select 0, %s8, %s6
  $region1: #{semantic_attention_einsum.1} parent=0
    #allocation2 [shape = 'u8[4096]{0}', space=vmem, size = 0x1000, scoped, tag = 'output window, operand 1, single buffered']
    #allocation3 [shape = 's32[1]{0}', space=sflag, size = 0x4, scoped, tag = 'scoped memory for semantic_attention_einsum.1']
    %10 = vsyncpa [#allocation3], 0
    // Predicated region
    $region2: #{semantic_attention_einsum.1} parent=1 // pred_check
      _
    $region3: #{semantic_attention_einsum.1} parent=1 // pred_check_branch
      %12 = sbr.rel (0) target = $region5
    $region4: #{semantic_attention_einsum.1} parent=1 // pred_region
      _
    $region5: #{semantic_attention_einsum.1} parent=1 // pred_fallthru
      _
    // Predicated region
    $region6: #{semantic_attention_einsum.1} parent=1 // pred_check
      _
    $region7: #{semantic_attention_einsum.1} parent=1 // pred_check_branch
      %14 = sbr.rel (0) target = $region9
    $region8: #{semantic_attention_einsum.1} parent=1 // pred_region
      _
    $region9: #{semantic_attention_einsum.1} parent=1 // pred_fallthru
      _
    // Predicated region
    $region10: #{semantic_attention_einsum.1} parent=1 // pred_check
      _
    $region11: #{semantic_attention_einsum.1} parent=1 // pred_check_branch
      %16 = sbr.rel (0) target = $region13
    $region12: #{semantic_attention_einsum.1} parent=1 // pred_region
      _
    $region13: #{semantic_attention_einsum.1} parent=1 // pred_fallthru
      _
    %v17 = vld [vmem:[%s0] sm:$0xff]
    %v18 = vld [vmem:[%s0 + $0x8] sm:$0xff]
    %v19 = vld [vmem:[%s0 + $0x10] sm:$0xff]
    %v20 = vld [vmem:[%s0 + $0x18] sm:$0xff]
    %v21 = vld [vmem:[%s0 + $0x20] sm:$0xff]
    %v22 = vld [vmem:[%s0 + $0x28] sm:$0xff]
    %v23 = vld [vmem:[%s0 + $0x30] sm:$0xff]
    %v24 = vld [vmem:[%s0 + $0x38] sm:$0xff]
    %v25 = vld [vmem:[%s0 + $0x40] sm:$0xff]
    %v26 = vld [vmem:[%s0 + $0x48] sm:$0xff]
    %v27 = vld [vmem:[%s0 + $0x50] sm:$0xff]
    %v28 = vld [vmem:[%s0 + $0x58] sm:$0xff]
    %v29 = vld [vmem:[%s0 + $0x60] sm:$0xff]
    %v30 = vld [vmem:[%s0 + $0x68] sm:$0xff]
    %v31 = vld [vmem:[%s0 + $0x70] sm:$0xff]
    %v32 = vld [vmem:[%s0 + $0x78] sm:$0xff]
    %v33 = vld [vmem:[%s0 + $0x80] sm:$0xff]
    %v34 = vld [vmem:[%s0 + $0x88] sm:$0xff]
    %v35 = vld [vmem:[%s0 + $0x90] sm:$0xff]
    %v36 = vld [vmem:[%s0 + $0x98] sm:$0xff]
    %v37 = vld [vmem:[%s0 + $0xa0] sm:$0xff]
    %v38 = vld [vmem:[%s0 + $0xa8] sm:$0xff]
    %v39 = vld [vmem:[%s0 + $0xb0] sm:$0xff]
    %v40 = vld [vmem:[%s0 + $0xb8] sm:$0xff]
    %v41 = vld [vmem:[%s0 + $0xc0] sm:$0xff]
    %v42 = vld [vmem:[%s0 + $0xc8] sm:$0xff]
    %v43 = vld [vmem:[%s0 + $0xd0] sm:$0xff]
    %v44 = vld [vmem:[%s0 + $0xd8] sm:$0xff]
    %v45 = vld [vmem:[%s0 + $0xe0] sm:$0xff]
    %v46 = vld [vmem:[%s0 + $0xe8] sm:$0xff]
    %v47 = vld [vmem:[%s0 + $0xf0] sm:$0xff]
    %v48 = vld [vmem:[%s0 + $0xf8] sm:$0xff]
    %v49 = vld [vmem:[%s0 + $0x100] sm:$0xff]
    %v50 = vld [vmem:[%s0 + $0x108] sm:$0xff]
    %v51 = vld [vmem:[%s0 + $0x110] sm:$0xff]
    %v52 = vld [vmem:[%s0 + $0x118] sm:$0xff]
    %v53 = vld [vmem:[%s0 + $0x120] sm:$0xff]
    %v54 = vld [vmem:[%s0 + $0x128] sm:$0xff]
    %v55 = vld [vmem:[%s0 + $0x130] sm:$0xff]
    %v56 = vld [vmem:[%s0 + $0x138] sm:$0xff]
    %v57 = vld [vmem:[%s0 + $0x140] sm:$0xff]
    %v58 = vld [vmem:[%s0 + $0x148] sm:$0xff]
    %v59 = vld [vmem:[%s0 + $0x150] sm:$0xff]
    %v60 = vld [vmem:[%s0 + $0x158] sm:$0xff]
    %v61 = vld [vmem:[%s0 + $0x160] sm:$0xff]
    %v62 = vld [vmem:[%s0 + $0x168] sm:$0xff]
    %v63 = vld [vmem:[%s0 + $0x170] sm:$0xff]
    %v64 = vld [vmem:[%s0 + $0x178] sm:$0xff]
    %v65 = vld [vmem:[%s0 + $0x180] sm:$0xff]
    %v66 = vld [vmem:[%s0 + $0x188] sm:$0xff]
    %v67 = vld [vmem:[%s0 + $0x190] sm:$0xff]
    %v68 = vld [vmem:[%s0 + $0x198] sm:$0xff]
    %v69 = vld [vmem:[%s0 + $0x1a0] sm:$0xff]
    %v70 = vld [vmem:[%s0 + $0x1a8] sm:$0xff]
    %v71 = vld [vmem:[%s0 + $0x1b0] sm:$0xff]
    %v72 = vld [vmem:[%s0 + $0x1b8] sm:$0xff]
    %v73 = vld [vmem:[%s0 + $0x1c0] sm:$0xff]
    %v74 = vld [vmem:[%s0 + $0x1c8] sm:$0xff]
    %v75 = vld [vmem:[%s0 + $0x1d0] sm:$0xff]
    %v76 = vld [vmem:[%s0 + $0x1d8] sm:$0xff]
    %v77 = vld [vmem:[%s0 + $0x1e0] sm:$0xff]
    %v78 = vld [vmem:[%s0 + $0x1e8] sm:$0xff]
    %v79 = vld [vmem:[%s0 + $0x1f0] sm:$0xff]
    %v80 = vld [vmem:[%s0 + $0x1f8] sm:$0xff]
    %v81 = vld [vmem:[%s0 + $0x200] sm:$0xff]
    %v82 = vld [vmem:[%s0 + $0x208] sm:$0xff]
    %v83 = vld [vmem:[%s0 + $0x210] sm:$0xff]
    %v84 = vld [vmem:[%s0 + $0x218] sm:$0xff]
    %v85 = vld [vmem:[%s0 + $0x220] sm:$0xff]
    %v86 = vld [vmem:[%s0 + $0x228] sm:$0xff]
    %v87 = vld [vmem:[%s0 + $0x230] sm:$0xff]
    %v88 = vld [vmem:[%s0 + $0x238] sm:$0xff]
    %v89 = vld [vmem:[%s0 + $0x240] sm:$0xff]
    %v90 = vld [vmem:[%s0 + $0x248] sm:$0xff]
    %v91 = vld [vmem:[%s0 + $0x250] sm:$0xff]
    %v92 = vld [vmem:[%s0 + $0x258] sm:$0xff]
    %v93 = vld [vmem:[%s0 + $0x260] sm:$0xff]
    %v94 = vld [vmem:[%s0 + $0x268] sm:$0xff]
    %v95 = vld [vmem:[%s0 + $0x270] sm:$0xff]
    %v96 = vld [vmem:[%s0 + $0x278] sm:$0xff]
    %v97 = vld [vmem:[%s0 + $0x280] sm:$0xff]
    %v98 = vld [vmem:[%s0 + $0x288] sm:$0xff]
    %v99 = vld [vmem:[%s0 + $0x290] sm:$0xff]
    %v100 = vld [vmem:[%s0 + $0x298] sm:$0xff]
    %v101 = vld [vmem:[%s0 + $0x2a0] sm:$0xff]
    %v102 = vld [vmem:[%s0 + $0x2a8] sm:$0xff]
    %v103 = vld [vmem:[%s0 + $0x2b0] sm:$0xff]
    %v104 = vld [vmem:[%s0 + $0x2b8] sm:$0xff]
    %v105 = vld [vmem:[%s0 + $0x2c0] sm:$0xff]
    %v106 = vld [vmem:[%s0 + $0x2c8] sm:$0xff]
    %v107 = vld [vmem:[%s0 + $0x2d0] sm:$0xff]
    %v108 = vld [vmem:[%s0 + $0x2d8] sm:$0xff]
    %v109 = vld [vmem:[%s0 + $0x2e0] sm:$0xff]
    %v110 = vld [vmem:[%s0 + $0x2e8] sm:$0xff]
    %v111 = vld [vmem:[%s0 + $0x2f0] sm:$0xff]
    %v112 = vld [vmem:[%s0 + $0x2f8] sm:$0xff]
    %v113 = vld [vmem:[%s0 + $0x300] sm:$0xff]
    %v114 = vld [vmem:[%s0 + $0x308] sm:$0xff]
    %v115 = vld [vmem:[%s0 + $0x310] sm:$0xff]
    %v116 = vld [vmem:[%s0 + $0x318] sm:$0xff]
    %v117 = vld [vmem:[%s0 + $0x320] sm:$0xff]
    %v118 = vld [vmem:[%s0 + $0x328] sm:$0xff]
    %v119 = vld [vmem:[%s0 + $0x330] sm:$0xff]
    %v120 = vld [vmem:[%s0 + $0x338] sm:$0xff]
    %v121 = vld [vmem:[%s0 + $0x340] sm:$0xff]
    %v122 = vld [vmem:[%s0 + $0x348] sm:$0xff]
    %v123 = vld [vmem:[%s0 + $0x350] sm:$0xff]
    %v124 = vld [vmem:[%s0 + $0x358] sm:$0xff]
    %v125 = vld [vmem:[%s0 + $0x360] sm:$0xff]
    %v126 = vld [vmem:[%s0 + $0x368] sm:$0xff]
    %v127 = vld [vmem:[%s0 + $0x370] sm:$0xff]
    %v128 = vld [vmem:[%s0 + $0x378] sm:$0xff]
    %v129 = vld [vmem:[%s0 + $0x380] sm:$0xff]
    %v130 = vld [vmem:[%s0 + $0x388] sm:$0xff]
    %v131 = vld [vmem:[%s0 + $0x390] sm:$0xff]
    %v132 = vld [vmem:[%s0 + $0x398] sm:$0xff]
    %v133 = vld [vmem:[%s0 + $0x3a0] sm:$0xff]
    %v134 = vld [vmem:[%s0 + $0x3a8] sm:$0xff]
    %v135 = vld [vmem:[%s0 + $0x3b0] sm:$0xff]
    %v136 = vld [vmem:[%s0 + $0x3b8] sm:$0xff]
    %v137 = vld [vmem:[%s0 + $0x3c0] sm:$0xff]
    %v138 = vld [vmem:[%s0 + $0x3c8] sm:$0xff]
    %v139 = vld [vmem:[%s0 + $0x3d0] sm:$0xff]
    %v140 = vld [vmem:[%s0 + $0x3d8] sm:$0xff]
    %v141 = vld [vmem:[%s0 + $0x3e0] sm:$0xff]
    %v142 = vld [vmem:[%s0 + $0x3e8] sm:$0xff]
    %v143 = vld [vmem:[%s0 + $0x3f0] sm:$0xff]
    %v144 = vld [vmem:[%s0 + $0x3f8] sm:$0xff]
    %v145 = vld [vmem:[%s1] sm:$0xff]
    %v146 = vld [vmem:[%s1 + $0x8] sm:$0xff]
    %v147 = vld [vmem:[%s1 + $0x10] sm:$0xff]
    %v148 = vld [vmem:[%s1 + $0x18] sm:$0xff]
    %v149 = vld [vmem:[%s1 + $0x20] sm:$0xff]
    %v150 = vld [vmem:[%s1 + $0x28] sm:$0xff]
    %v151 = vld [vmem:[%s1 + $0x30] sm:$0xff]
    %v152 = vld [vmem:[%s1 + $0x38] sm:$0xff]
    %v153 = vld [vmem:[%s2] sm:$0xf]
    %vm154 = vcmask 261120
    %v156 = vsel %vm154, %v145, 0
    %v159 = vsel %vm154, %v146, 0
    %v162 = vsel %vm154, %v17, 0
    %v165 = vsel %vm154, %v18, 0
    %v168 = vsel %vm154, %v19, 0
    %v171 = vsel %vm154, %v20, 0
    %v174 = vsel %vm154, %v21, 0
    %v177 = vsel %vm154, %v22, 0
    %v180 = vsel %vm154, %v23, 0
    %v183 = vsel %vm154, %v24, 0
    %v186 = vsel %vm154, %v25, 0
    %v189 = vsel %vm154, %v26, 0
    %v192 = vsel %vm154, %v27, 0
    %v195 = vsel %vm154, %v28, 0
    %v198 = vsel %vm154, %v29, 0
    %v201 = vsel %vm154, %v30, 0
    %v204 = vsel %vm154, %v31, 0
    %v207 = vsel %vm154, %v32, 0
    %v210 = vsel %vm154, %v33, 0
    %v213 = vsel %vm154, %v34, 0
    %v216 = vsel %vm154, %v35, 0
    %v219 = vsel %vm154, %v36, 0
    %v222 = vsel %vm154, %v37, 0
    %v225 = vsel %vm154, %v38, 0
    %v228 = vsel %vm154, %v39, 0
    %v231 = vsel %vm154, %v40, 0
    %v234 = vsel %vm154, %v41, 0
    %v237 = vsel %vm154, %v42, 0
    %v240 = vsel %vm154, %v43, 0
    %v243 = vsel %vm154, %v44, 0
    %v246 = vsel %vm154, %v45, 0
    %v249 = vsel %vm154, %v46, 0
    %v252 = vsel %vm154, %v47, 0
    %v255 = vsel %vm154, %v48, 0
    %257 = vmatprep.subr.mxu0 0.0
    %258 = vmatpush1.xpose.msra.mxu0 %v207
    %259 = vmatprep.subr.mxu0 0.0
    %260 = vmatpush1.xpose.msra.mxu0 %v204
    %261 = vmatprep.subr.mxu0 0.0
    %262 = vmatpush1.xpose.msra.mxu0 %v201
    %263 = vmatprep.subr.mxu0 0.0
    %264 = vmatpush1.xpose.msra.mxu0 %v198
    %265 = vmatprep.subr.mxu0 0.0
    %266 = vmatpush1.xpose.msra.mxu0 %v195
    %267 = vmatprep.subr.mxu0 0.0
    %268 = vmatpush1.xpose.msra.mxu0 %v192
    %269 = vmatprep.subr.mxu0 0.0
    %270 = vmatpush1.xpose.msra.mxu0 %v189
    %271 = vmatprep.subr.mxu0 0.0
    %272 = vmatpush1.xpose.msra.mxu0 %v186
    %273 = vmatprep.subr.mxu0 0.0
    %274 = vmatpush1.xpose.msra.mxu0 %v183
    %275 = vmatprep.subr.mxu0 0.0
    %276 = vmatpush1.xpose.msra.mxu0 %v180
    %277 = vmatprep.subr.mxu0 0.0
    %278 = vmatpush1.xpose.msra.mxu0 %v177
    %279 = vmatprep.subr.mxu0 0.0
    %280 = vmatpush1.xpose.msra.mxu0 %v174
    %281 = vmatprep.subr.mxu0 0.0
    %282 = vmatpush1.xpose.msra.mxu0 %v171
    %283 = vmatprep.subr.mxu0 0.0
    %284 = vmatpush1.xpose.msra.mxu0 %v168
    %285 = vmatprep.subr.mxu0 0.0
    %286 = vmatpush1.xpose.msra.mxu0 %v165
    %287 = vmatprep.subr.mxu0 0.0
    %288 = vmatpush1.xpose.msra.mxu0 %v162
    %289 = vmatprep.subr.mxu0 0.0
    %290 = vmatpush2.xpose.msra.mxu0 %v255
    %291 = vmatprep.subr.mxu0 0.0
    %292 = vmatpush2.xpose.msra.mxu0 %v252
    %293 = vmatprep.subr.mxu0 0.0
    %294 = vmatpush2.xpose.msra.mxu0 %v249
    %295 = vmatprep.subr.mxu0 0.0
    %296 = vmatpush2.xpose.msra.mxu0 %v246
    %297 = vmatprep.subr.mxu0 0.0
    %298 = vmatpush2.xpose.msra.mxu0 %v243
    %299 = vmatprep.subr.mxu0 0.0
    %300 = vmatpush2.xpose.msra.mxu0 %v240
    %301 = vmatprep.subr.mxu0 0.0
    %302 = vmatpush2.xpose.msra.mxu0 %v237
    %303 = vmatprep.subr.mxu0 0.0
    %304 = vmatpush2.xpose.msra.mxu0 %v234
    %305 = vmatprep.subr.mxu0 0.0
    %306 = vmatpush2.xpose.msra.mxu0 %v231
    %307 = vmatprep.subr.mxu0 0.0
    %308 = vmatpush2.xpose.msra.mxu0 %v228
    %309 = vmatprep.subr.mxu0 0.0
    %310 = vmatpush2.xpose.msra.mxu0 %v225
    %311 = vmatprep.subr.mxu0 0.0
    %312 = vmatpush2.xpose.msra.mxu0 %v222
    %313 = vmatprep.subr.mxu0 0.0
    %314 = vmatpush2.xpose.msra.mxu0 %v219
    %315 = vmatprep.subr.mxu0 0.0
    %316 = vmatpush2.xpose.msra.mxu0 %v216
    %317 = vmatprep.subr.mxu0 0.0
    %318 = vmatpush2.xpose.msra.mxu0 %v213
    %319 = vmatprep.subr.mxu0 0.0
    %320 = vmatpush2.xpose.msra.mxu0 %v210
    %321 = vmatprep.mubr.f32.mxu0 0.0
    %322 = vmatmul.mubr.f32.gmra.mxu0 %v156
    %v323 = vpop.f32.mrf.mxu0
    %v324 = vadd.f32 0.0, %v323
    %v325 = vpop.f32.mrf.mxu0
    %v326 = vadd.f32 0.0, %v325
    %327 = vmatprep.mubr.f32.mxu0 0.0
    %328 = vmatmul.mubr.f32.gmra.mxu0 %v159
    %v329 = vpop.f32.mrf.mxu0
    %v330 = vadd.f32 0.0, %v329
    %v331 = vpop.f32.mrf.mxu0
    %v332 = vadd.f32 0.0, %v331
    %333 = vdwg.mxu0
    %v335 = vsel %vm154, %v147, 0
    %v338 = vsel %vm154, %v148, 0
    %v341 = vsel %vm154, %v49, 0
    %v344 = vsel %vm154, %v50, 0
    %v347 = vsel %vm154, %v51, 0
    %v350 = vsel %vm154, %v52, 0
    %v353 = vsel %vm154, %v53, 0
    %v356 = vsel %vm154, %v54, 0
    %v359 = vsel %vm154, %v55, 0
    %v362 = vsel %vm154, %v56, 0
    %v365 = vsel %vm154, %v57, 0
    %v368 = vsel %vm154, %v58, 0
    %v371 = vsel %vm154, %v59, 0
    %v374 = vsel %vm154, %v60, 0
    %v377 = vsel %vm154, %v61, 0
    %v380 = vsel %vm154, %v62, 0
    %v383 = vsel %vm154, %v63, 0
    %v386 = vsel %vm154, %v64, 0
    %v389 = vsel %vm154, %v65, 0
    %v392 = vsel %vm154, %v66, 0
    %v395 = vsel %vm154, %v67, 0
    %v398 = vsel %vm154, %v68, 0
    %v401 = vsel %vm154, %v69, 0
    %v404 = vsel %vm154, %v70, 0
    %v407 = vsel %vm154, %v71, 0
    %v410 = vsel %vm154, %v72, 0
    %v413 = vsel %vm154, %v73, 0
    %v416 = vsel %vm154, %v74, 0
    %v419 = vsel %vm154, %v75, 0
    %v422 = vsel %vm154, %v76, 0
    %v425 = vsel %vm154, %v77, 0
    %v428 = vsel %vm154, %v78, 0
    %v431 = vsel %vm154, %v79, 0
    %v434 = vsel %vm154, %v80, 0
    %436 = vmatprep.subr.mxu0 0.0
    %437 = vmatpush1.xpose.msra.mxu0 %v386
    %438 = vmatprep.subr.mxu0 0.0
    %439 = vmatpush1.xpose.msra.mxu0 %v383
    %440 = vmatprep.subr.mxu0 0.0
    %441 = vmatpush1.xpose.msra.mxu0 %v380
    %442 = vmatprep.subr.mxu0 0.0
    %443 = vmatpush1.xpose.msra.mxu0 %v377
    %444 = vmatprep.subr.mxu0 0.0
    %445 = vmatpush1.xpose.msra.mxu0 %v374
    %446 = vmatprep.subr.mxu0 0.0
    %447 = vmatpush1.xpose.msra.mxu0 %v371
    %448 = vmatprep.subr.mxu0 0.0
    %449 = vmatpush1.xpose.msra.mxu0 %v368
    %450 = vmatprep.subr.mxu0 0.0
    %451 = vmatpush1.xpose.msra.mxu0 %v365
    %452 = vmatprep.subr.mxu0 0.0
    %453 = vmatpush1.xpose.msra.mxu0 %v362
    %454 = vmatprep.subr.mxu0 0.0
    %455 = vmatpush1.xpose.msra.mxu0 %v359
    %456 = vmatprep.subr.mxu0 0.0
    %457 = vmatpush1.xpose.msra.mxu0 %v356
    %458 = vmatprep.subr.mxu0 0.0
    %459 = vmatpush1.xpose.msra.mxu0 %v353
    %460 = vmatprep.subr.mxu0 0.0
    %461 = vmatpush1.xpose.msra.mxu0 %v350
    %462 = vmatprep.subr.mxu0 0.0
    %463 = vmatpush1.xpose.msra.mxu0 %v347
    %464 = vmatprep.subr.mxu0 0.0
    %465 = vmatpush1.xpose.msra.mxu0 %v344
    %466 = vmatprep.subr.mxu0 0.0
    %467 = vmatpush1.xpose.msra.mxu0 %v341
    %468 = vmatprep.subr.mxu0 0.0
    %469 = vmatpush2.xpose.msra.mxu0 %v434
    %470 = vmatprep.subr.mxu0 0.0
    %471 = vmatpush2.xpose.msra.mxu0 %v431
    %472 = vmatprep.subr.mxu0 0.0
    %473 = vmatpush2.xpose.msra.mxu0 %v428
    %474 = vmatprep.subr.mxu0 0.0
    %475 = vmatpush2.xpose.msra.mxu0 %v425
    %476 = vmatprep.subr.mxu0 0.0
    %477 = vmatpush2.xpose.msra.mxu0 %v422
    %478 = vmatprep.subr.mxu0 0.0
    %479 = vmatpush2.xpose.msra.mxu0 %v419
    %480 = vmatprep.subr.mxu0 0.0
    %481 = vmatpush2.xpose.msra.mxu0 %v416
    %482 = vmatprep.subr.mxu0 0.0
    %483 = vmatpush2.xpose.msra.mxu0 %v413
    %484 = vmatprep.subr.mxu0 0.0
    %485 = vmatpush2.xpose.msra.mxu0 %v410
    %486 = vmatprep.subr.mxu0 0.0
    %487 = vmatpush2.xpose.msra.mxu0 %v407
    %488 = vmatprep.subr.mxu0 0.0
    %489 = vmatpush2.xpose.msra.mxu0 %v404
    %490 = vmatprep.subr.mxu0 0.0
    %491 = vmatpush2.xpose.msra.mxu0 %v401
    %492 = vmatprep.subr.mxu0 0.0
    %493 = vmatpush2.xpose.msra.mxu0 %v398
    %494 = vmatprep.subr.mxu0 0.0
    %495 = vmatpush2.xpose.msra.mxu0 %v395
    %496 = vmatprep.subr.mxu0 0.0
    %497 = vmatpush2.xpose.msra.mxu0 %v392
    %498 = vmatprep.subr.mxu0 0.0
    %499 = vmatpush2.xpose.msra.mxu0 %v389
    %500 = vmatprep.mubr.f32.mxu0 0.0
    %501 = vmatmul.mubr.f32.gmra.mxu0 %v335
    %v502 = vpop.f32.mrf.mxu0
    %v503 = vadd.f32 0.0, %v502
    %v504 = vpop.f32.mrf.mxu0
    %v505 = vadd.f32 0.0, %v504
    %506 = vmatprep.mubr.f32.mxu0 0.0
    %507 = vmatmul.mubr.f32.gmra.mxu0 %v338
    %v508 = vpop.f32.mrf.mxu0
    %v509 = vadd.f32 0.0, %v508
    %v510 = vpop.f32.mrf.mxu0
    %v511 = vadd.f32 0.0, %v510
    %512 = vdwg.mxu0
    %v514 = vsel %vm154, %v149, 0
    %v517 = vsel %vm154, %v150, 0
    %v520 = vsel %vm154, %v81, 0
    %v523 = vsel %vm154, %v82, 0
    %v526 = vsel %vm154, %v83, 0
    %v529 = vsel %vm154, %v84, 0
    %v532 = vsel %vm154, %v85, 0
    %v535 = vsel %vm154, %v86, 0
    %v538 = vsel %vm154, %v87, 0
    %v541 = vsel %vm154, %v88, 0
    %v544 = vsel %vm154, %v89, 0
    %v547 = vsel %vm154, %v90, 0
    %v550 = vsel %vm154, %v91, 0
    %v553 = vsel %vm154, %v92, 0
    %v556 = vsel %vm154, %v93, 0
    %v559 = vsel %vm154, %v94, 0
    %v562 = vsel %vm154, %v95, 0
    %v565 = vsel %vm154, %v96, 0
    %v568 = vsel %vm154, %v97, 0
    %v571 = vsel %vm154, %v98, 0
    %v574 = vsel %vm154, %v99, 0
    %v577 = vsel %vm154, %v100, 0
    %v580 = vsel %vm154, %v101, 0
    %v583 = vsel %vm154, %v102, 0
    %v586 = vsel %vm154, %v103, 0
    %v589 = vsel %vm154, %v104, 0
    %v592 = vsel %vm154, %v105, 0
    %v595 = vsel %vm154, %v106, 0
    %v598 = vsel %vm154, %v107, 0
    %v601 = vsel %vm154, %v108, 0
    %v604 = vsel %vm154, %v109, 0
    %v607 = vsel %vm154, %v110, 0
    %v610 = vsel %vm154, %v111, 0
    %v613 = vsel %vm154, %v112, 0
    %615 = vmatprep.subr.mxu0 0.0
    %616 = vmatpush1.xpose.msra.mxu0 %v565
    %617 = vmatprep.subr.mxu0 0.0
    %618 = vmatpush1.xpose.msra.mxu0 %v562
    %619 = vmatprep.subr.mxu0 0.0
    %620 = vmatpush1.xpose.msra.mxu0 %v559
    %621 = vmatprep.subr.mxu0 0.0
    %622 = vmatpush1.xpose.msra.mxu0 %v556
    %623 = vmatprep.subr.mxu0 0.0
    %624 = vmatpush1.xpose.msra.mxu0 %v553
    %625 = vmatprep.subr.mxu0 0.0
    %626 = vmatpush1.xpose.msra.mxu0 %v550
    %627 = vmatprep.subr.mxu0 0.0
    %628 = vmatpush1.xpose.msra.mxu0 %v547
    %629 = vmatprep.subr.mxu0 0.0
    %630 = vmatpush1.xpose.msra.mxu0 %v544
    %631 = vmatprep.subr.mxu0 0.0
    %632 = vmatpush1.xpose.msra.mxu0 %v541
    %633 = vmatprep.subr.mxu0 0.0
    %634 = vmatpush1.xpose.msra.mxu0 %v538
    %635 = vmatprep.subr.mxu0 0.0
    %636 = vmatpush1.xpose.msra.mxu0 %v535
    %637 = vmatprep.subr.mxu0 0.0
    %638 = vmatpush1.xpose.msra.mxu0 %v532
    %639 = vmatprep.subr.mxu0 0.0
    %640 = vmatpush1.xpose.msra.mxu0 %v529
    %641 = vmatprep.subr.mxu0 0.0
    %642 = vmatpush1.xpose.msra.mxu0 %v526
    %643 = vmatprep.subr.mxu0 0.0
    %644 = vmatpush1.xpose.msra.mxu0 %v523
    %645 = vmatprep.subr.mxu0 0.0
    %646 = vmatpush1.xpose.msra.mxu0 %v520
    %647 = vmatprep.subr.mxu0 0.0
    %648 = vmatpush2.xpose.msra.mxu0 %v613
    %649 = vmatprep.subr.mxu0 0.0
    %650 = vmatpush2.xpose.msra.mxu0 %v610
    %651 = vmatprep.subr.mxu0 0.0
    %652 = vmatpush2.xpose.msra.mxu0 %v607
    %653 = vmatprep.subr.mxu0 0.0
    %654 = vmatpush2.xpose.msra.mxu0 %v604
    %655 = vmatprep.subr.mxu0 0.0
    %656 = vmatpush2.xpose.msra.mxu0 %v601
    %657 = vmatprep.subr.mxu0 0.0
    %658 = vmatpush2.xpose.msra.mxu0 %v598
    %659 = vmatprep.subr.mxu0 0.0
    %660 = vmatpush2.xpose.msra.mxu0 %v595
    %661 = vmatprep.subr.mxu0 0.0
    %662 = vmatpush2.xpose.msra.mxu0 %v592
    %663 = vmatprep.subr.mxu0 0.0
    %664 = vmatpush2.xpose.msra.mxu0 %v589
    %665 = vmatprep.subr.mxu0 0.0
    %666 = vmatpush2.xpose.msra.mxu0 %v586
    %667 = vmatprep.subr.mxu0 0.0
    %668 = vmatpush2.xpose.msra.mxu0 %v583
    %669 = vmatprep.subr.mxu0 0.0
    %670 = vmatpush2.xpose.msra.mxu0 %v580
    %671 = vmatprep.subr.mxu0 0.0
    %672 = vmatpush2.xpose.msra.mxu0 %v577
    %673 = vmatprep.subr.mxu0 0.0
    %674 = vmatpush2.xpose.msra.mxu0 %v574
    %675 = vmatprep.subr.mxu0 0.0
    %676 = vmatpush2.xpose.msra.mxu0 %v571
    %677 = vmatprep.subr.mxu0 0.0
    %678 = vmatpush2.xpose.msra.mxu0 %v568
    %679 = vmatprep.mubr.f32.mxu0 0.0
    %680 = vmatmul.mubr.f32.gmra.mxu0 %v514
    %v681 = vpop.f32.mrf.mxu0
    %v682 = vadd.f32 0.0, %v681
    %v683 = vpop.f32.mrf.mxu0
    %v684 = vadd.f32 0.0, %v683
    %685 = vmatprep.mubr.f32.mxu0 0.0
    %686 = vmatmul.mubr.f32.gmra.mxu0 %v517
    %v687 = vpop.f32.mrf.mxu0
    %v688 = vadd.f32 0.0, %v687
    %v689 = vpop.f32.mrf.mxu0
    %v690 = vadd.f32 0.0, %v689
    %691 = vdwg.mxu0
    %v693 = vsel %vm154, %v151, 0
    %v696 = vsel %vm154, %v152, 0
    %v699 = vsel %vm154, %v113, 0
    %v702 = vsel %vm154, %v114, 0
    %v705 = vsel %vm154, %v115, 0
    %v708 = vsel %vm154, %v116, 0
    %v711 = vsel %vm154, %v117, 0
    %v714 = vsel %vm154, %v118, 0
    %v717 = vsel %vm154, %v119, 0
    %v720 = vsel %vm154, %v120, 0
    %v723 = vsel %vm154, %v121, 0
    %v726 = vsel %vm154, %v122, 0
    %v729 = vsel %vm154, %v123, 0
    %v732 = vsel %vm154, %v124, 0
    %v735 = vsel %vm154, %v125, 0
    %v738 = vsel %vm154, %v126, 0
    %v741 = vsel %vm154, %v127, 0
    %v744 = vsel %vm154, %v128, 0
    %v747 = vsel %vm154, %v129, 0
    %v750 = vsel %vm154, %v130, 0
    %v753 = vsel %vm154, %v131, 0
    %v756 = vsel %vm154, %v132, 0
    %v759 = vsel %vm154, %v133, 0
    %v762 = vsel %vm154, %v134, 0
    %v765 = vsel %vm154, %v135, 0
    %v768 = vsel %vm154, %v136, 0
    %v771 = vsel %vm154, %v137, 0
    %v774 = vsel %vm154, %v138, 0
    %v777 = vsel %vm154, %v139, 0
    %v780 = vsel %vm154, %v140, 0
    %v783 = vsel %vm154, %v141, 0
    %v786 = vsel %vm154, %v142, 0
    %v789 = vsel %vm154, %v143, 0
    %v792 = vsel %vm154, %v144, 0
    %794 = vmatprep.subr.mxu0 0.0
    %795 = vmatpush1.xpose.msra.mxu0 %v744
    %796 = vmatprep.subr.mxu0 0.0
    %797 = vmatpush1.xpose.msra.mxu0 %v741
    %798 = vmatprep.subr.mxu0 0.0
    %799 = vmatpush1.xpose.msra.mxu0 %v738
    %800 = vmatprep.subr.mxu0 0.0
    %801 = vmatpush1.xpose.msra.mxu0 %v735
    %802 = vmatprep.subr.mxu0 0.0
    %803 = vmatpush1.xpose.msra.mxu0 %v732
    %804 = vmatprep.subr.mxu0 0.0
    %805 = vmatpush1.xpose.msra.mxu0 %v729
    %806 = vmatprep.subr.mxu0 0.0
    %807 = vmatpush1.xpose.msra.mxu0 %v726
    %808 = vmatprep.subr.mxu0 0.0
    %809 = vmatpush1.xpose.msra.mxu0 %v723
    %810 = vmatprep.subr.mxu0 0.0
    %811 = vmatpush1.xpose.msra.mxu0 %v720
    %812 = vmatprep.subr.mxu0 0.0
    %813 = vmatpush1.xpose.msra.mxu0 %v717
    %814 = vmatprep.subr.mxu0 0.0
    %815 = vmatpush1.xpose.msra.mxu0 %v714
    %816 = vmatprep.subr.mxu0 0.0
    %817 = vmatpush1.xpose.msra.mxu0 %v711
    %818 = vmatprep.subr.mxu0 0.0
    %819 = vmatpush1.xpose.msra.mxu0 %v708
    %820 = vmatprep.subr.mxu0 0.0
    %821 = vmatpush1.xpose.msra.mxu0 %v705
    %822 = vmatprep.subr.mxu0 0.0
    %823 = vmatpush1.xpose.msra.mxu0 %v702
    %824 = vmatprep.subr.mxu0 0.0
    %825 = vmatpush1.xpose.msra.mxu0 %v699
    %826 = vmatprep.subr.mxu0 0.0
    %827 = vmatpush2.xpose.msra.mxu0 %v792
    %828 = vmatprep.subr.mxu0 0.0
    %829 = vmatpush2.xpose.msra.mxu0 %v789
    %830 = vmatprep.subr.mxu0 0.0
    %831 = vmatpush2.xpose.msra.mxu0 %v786
    %832 = vmatprep.subr.mxu0 0.0
    %833 = vmatpush2.xpose.msra.mxu0 %v783
    %834 = vmatprep.subr.mxu0 0.0
    %835 = vmatpush2.xpose.msra.mxu0 %v780
    %836 = vmatprep.subr.mxu0 0.0
    %837 = vmatpush2.xpose.msra.mxu0 %v777
    %838 = vmatprep.subr.mxu0 0.0
    %839 = vmatpush2.xpose.msra.mxu0 %v774
    %840 = vmatprep.subr.mxu0 0.0
    %841 = vmatpush2.xpose.msra.mxu0 %v771
    %842 = vmatprep.subr.mxu0 0.0
    %843 = vmatpush2.xpose.msra.mxu0 %v768
    %844 = vmatprep.subr.mxu0 0.0
    %845 = vmatpush2.xpose.msra.mxu0 %v765
    %846 = vmatprep.subr.mxu0 0.0
    %847 = vmatpush2.xpose.msra.mxu0 %v762
    %848 = vmatprep.subr.mxu0 0.0
    %849 = vmatpush2.xpose.msra.mxu0 %v759
    %850 = vmatprep.subr.mxu0 0.0
    %851 = vmatpush2.xpose.msra.mxu0 %v756
    %852 = vmatprep.subr.mxu0 0.0
    %853 = vmatpush2.xpose.msra.mxu0 %v753
    %854 = vmatprep.subr.mxu0 0.0
    %855 = vmatpush2.xpose.msra.mxu0 %v750
    %856 = vmatprep.subr.mxu0 0.0
    %857 = vmatpush2.xpose.msra.mxu0 %v747
    %858 = vmatprep.mubr.f32.mxu0 0.0
    %859 = vmatmul.mubr.f32.gmra.mxu0 %v693
    %v860 = vpop.f32.mrf.mxu0
    %v861 = vadd.f32 0.0, %v860
    %v862 = vpop.f32.mrf.mxu0
    %v863 = vadd.f32 0.0, %v862
    %864 = vmatprep.mubr.f32.mxu0 0.0
    %865 = vmatmul.mubr.f32.gmra.mxu0 %v696
    %v866 = vpop.f32.mrf.mxu0
    %v867 = vadd.f32 0.0, %v866
    %v868 = vpop.f32.mrf.mxu0
    %v869 = vadd.f32 0.0, %v868
    %870 = vdwg.mxu0
    %v871 = vtanh.pop %v324
    %v872 = vtanh.pop %v326
    %v873 = vtanh.pop %v330
    %v874 = vtanh.pop %v332
    %v875 = vtanh.pop %v503
    %v876 = vtanh.pop %v505
    %v877 = vtanh.pop %v509
    %v878 = vtanh.pop %v511
    %v879 = vtanh.pop %v682
    %v880 = vtanh.pop %v684
    %v881 = vtanh.pop %v688
    %v882 = vtanh.pop %v690
    %v883 = vtanh.pop %v861
    %v884 = vtanh.pop %v863
    %v885 = vtanh.pop %v867
    %v886 = vtanh.pop %v869
    %v887 = vlaneseq
    %v888 = vshrl.u32 %v887, 7
    %v889 = vsub.s32 0, %v888
    %v890 = vrot.slane %v153, %v889
    %892 = vbcast.lane.b32.xlu0 %v890, 256
    %v893 = vpop.permute.xlu0 %892
    %s895 = sor.u32 256, 8
    %896 = vbcast.lane.b32.xlu0 %v890, %s895
    %v897 = vpop.permute.xlu0 %896
    %v898 = vlaneseq
    %v899 = vshrl.u32 %v898, 7
    %v900 = vsub.s32 1, %v899
    %v901 = vrot.slane %v153, %v900
    %903 = vbcast.lane.b32.xlu0 %v901, 256
    %v904 = vpop.permute.xlu0 %903
    %s906 = sor.u32 256, 8
    %907 = vbcast.lane.b32.xlu0 %v901, %s906
    %v908 = vpop.permute.xlu0 %907
    %v909 = vlaneseq
    %v910 = vshrl.u32 %v909, 7
    %v911 = vsub.s32 2, %v910
    %v912 = vrot.slane %v153, %v911
    %914 = vbcast.lane.b32.xlu0 %v912, 256
    %v915 = vpop.permute.xlu0 %914
    %s917 = sor.u32 256, 8
    %918 = vbcast.lane.b32.xlu0 %v912, %s917
    %v919 = vpop.permute.xlu0 %918
    %v920 = vlaneseq
    %v921 = vshrl.u32 %v920, 7
    %v922 = vsub.s32 3, %v921
    %v923 = vrot.slane %v153, %v922
    %925 = vbcast.lane.b32.xlu0 %v923, 256
    %v926 = vpop.permute.xlu0 %925
    %s928 = sor.u32 256, 8
    %929 = vbcast.lane.b32.xlu0 %v923, %s928
    %v930 = vpop.permute.xlu0 %929
    %v931 = vmul.f32 %v871, %v893
    %v932 = vmul.f32 %v872, %v893
    %v933 = vmul.f32 %v873, %v897
    %v934 = vmul.f32 %v874, %v897
    %v935 = vmul.f32 %v875, %v904
    %v936 = vmul.f32 %v876, %v904
    %v937 = vmul.f32 %v877, %v908
    %v938 = vmul.f32 %v878, %v908
    %v939 = vmul.f32 %v879, %v915
    %v940 = vmul.f32 %v880, %v915
    %v941 = vmul.f32 %v881, %v919
    %v942 = vmul.f32 %v882, %v919
    %v943 = vmul.f32 %v883, %v926
    %v944 = vmul.f32 %v884, %v926
    %v945 = vmul.f32 %v885, %v930
    %v946 = vmul.f32 %v886, %v930
    %v947 = vadd.f32 %v931, %v933
    %v948 = vrot.slane %v947, 4
    %v949 = vadd.f32 %v947, %v948
    %v950 = vrot.slane %v949, 2
    %v951 = vadd.f32 %v949, %v950
    %v952 = vrot.slane %v951, 1
    %v953 = vadd.f32 %v951, %v952
    %v954 = vadd.f32 %v932, %v934
    %v955 = vrot.slane %v954, 4
    %v956 = vadd.f32 %v954, %v955
    %v957 = vrot.slane %v956, 2
    %v958 = vadd.f32 %v956, %v957
    %v959 = vrot.slane %v958, 1
    %v960 = vadd.f32 %v958, %v959
    %v961 = vadd.f32 %v935, %v937
    %v962 = vrot.slane %v961, 4
    %v963 = vadd.f32 %v961, %v962
    %v964 = vrot.slane %v963, 2
    %v965 = vadd.f32 %v963, %v964
    %v966 = vrot.slane %v965, 1
    %v967 = vadd.f32 %v965, %v966
    %v968 = vadd.f32 %v936, %v938
    %v969 = vrot.slane %v968, 4
    %v970 = vadd.f32 %v968, %v969
    %v971 = vrot.slane %v970, 2
    %v972 = vadd.f32 %v970, %v971
    %v973 = vrot.slane %v972, 1
    %v974 = vadd.f32 %v972, %v973
    %v975 = vadd.f32 %v939, %v941
    %v976 = vrot.slane %v975, 4
    %v977 = vadd.f32 %v975, %v976
    %v978 = vrot.slane %v977, 2
    %v979 = vadd.f32 %v977, %v978
    %v980 = vrot.slane %v979, 1
    %v981 = vadd.f32 %v979, %v980
    %v982 = vadd.f32 %v940, %v942
    %v983 = vrot.slane %v982, 4
    %v984 = vadd.f32 %v982, %v983
    %v985 = vrot.slane %v984, 2
    %v986 = vadd.f32 %v984, %v985
    %v987 = vrot.slane %v986, 1
    %v988 = vadd.f32 %v986, %v987
    %v989 = vadd.f32 %v943, %v945
    %v990 = vrot.slane %v989, 4
    %v991 = vadd.f32 %v989, %v990
    %v992 = vrot.slane %v991, 2
    %v993 = vadd.f32 %v991, %v992
    %v994 = vrot.slane %v993, 1
    %v995 = vadd.f32 %v993, %v994
    %v996 = vadd.f32 %v944, %v946
    %v997 = vrot.slane %v996, 4
    %v998 = vadd.f32 %v996, %v997
    %v999 = vrot.slane %v998, 2
    %v1000 = vadd.f32 %v998, %v999
    %v1001 = vrot.slane %v1000, 1
    %v1002 = vadd.f32 %v1000, %v1001
    %v1003 = vmax.f32 %v953, %v981
    %v1004 = vmax.f32 %v967, %v995
    %v1005 = vmax.f32 %v1003, %v1004
    %v1006 = vmax.f32 %v960, %v988
    %v1007 = vmax.f32 %v974, %v1002
    %v1008 = vmax.f32 %v1006, %v1007
    %v1009 = vsub.f32 %v953, %v1005
    %v1010 = vsub.f32 %v960, %v1008
    %v1011 = vsub.f32 %v967, %v1005
    %v1012 = vsub.f32 %v974, %v1008
    %v1013 = vsub.f32 %v981, %v1005
    %v1014 = vsub.f32 %v988, %v1008
    %v1015 = vsub.f32 %v995, %v1005
    %v1016 = vsub.f32 %v1002, %v1008
    %v1017 = vmul.f32 %v1009, 1.442695
    %v1018 = vpow.pop %v1017
    %v1019 = vmul.f32 %v1010, 1.442695
    %v1020 = vpow.pop %v1019
    %v1021 = vmul.f32 %v1011, 1.442695
    %v1022 = vpow.pop %v1021
    %v1023 = vmul.f32 %v1012, 1.442695
    %v1024 = vpow.pop %v1023
    %v1025 = vmul.f32 %v1013, 1.442695
    %v1026 = vpow.pop %v1025
    %v1027 = vmul.f32 %v1014, 1.442695
    %v1028 = vpow.pop %v1027
    %v1029 = vmul.f32 %v1015, 1.442695
    %v1030 = vpow.pop %v1029
    %v1031 = vmul.f32 %v1016, 1.442695
    %v1032 = vpow.pop %v1031
    %v1041 = vrot.slane %v1022, 7
    %vm1042 = vcmask 1041409
    %v1043 = vsel %vm1042, %v1041, %v1018
    %v1044 = vrot.slane %v1026, 6
    %vm1045 = vcmask 1042434
    %v1046 = vsel %vm1045, %v1044, %v1043
    %v1047 = vrot.slane %v1030, 5
    %vm1048 = vcmask 1043459
    %v1049 = vsel %vm1048, %v1047, %v1046
    %v1050 = vrot.slane %v1024, 7
    %v1051 = vsel %vm1042, %v1050, %v1020
    %v1052 = vrot.slane %v1028, 6
    %v1053 = vsel %vm1045, %v1052, %v1051
    %v1054 = vrot.slane %v1032, 5
    %v1055 = vsel %vm1048, %v1054, %v1053
    %vm1058 = vcmask 1043456
    %v1059 = vsel %vm1058, %v1049, 0.0
    %v1060 = vrot.slane %v1059, 4
    %v1061 = vadd.f32 %v1059, %v1060
    %v1062 = vrot.slane %v1061, 2
    %v1063 = vadd.f32 %v1061, %v1062
    %v1064 = vrot.slane %v1063, 1
    %v1065 = vadd.f32 %v1063, %v1064
    %v1066 = vsel %vm1058, %v1055, 0.0
    %v1067 = vrot.slane %v1066, 4
    %v1068 = vadd.f32 %v1066, %v1067
    %v1069 = vrot.slane %v1068, 2
    %v1070 = vadd.f32 %v1068, %v1069
    %v1071 = vrot.slane %v1070, 1
    %v1072 = vadd.f32 %v1070, %v1071
    %v1073 = vrcp.pop %v1065
    %v1074 = vrcp.pop %v1072
    %v1075 = vlaneseq
    %v1076 = vshrl.u32 %v1075, 7
    %v1077 = vsub.s32 0, %v1076
    %v1078 = vrot.slane %v1073, %v1077
    %v1079 = vlaneseq
    %v1080 = vshrl.u32 %v1079, 7
    %v1081 = vsub.s32 0, %v1080
    %v1082 = vrot.slane %v1074, %v1081
    %v1083 = vmul.f32 %v1018, %v1078
    %v1084 = vmul.f32 %v1020, %v1082
    %v1085 = vmul.f32 %v1022, %v1078
    %v1086 = vmul.f32 %v1024, %v1082
    %v1087 = vmul.f32 %v1026, %v1078
    %v1088 = vmul.f32 %v1028, %v1082
    %v1089 = vmul.f32 %v1030, %v1078
    %v1090 = vmul.f32 %v1032, %v1082
    %v1099 = vcombine.low %v1083, %v1084
    %v1100 = vcombine.low %v1085, %v1086
    %v1101 = vcombine.low %v1087, %v1088
    %v1102 = vcombine.low %v1089, %v1090
    %v1103 = vrot.slane %v1100, 7
    %v1104 = vsel %vm1042, %v1103, %v1099
    %vm1105 = vcmask 1045509
    %v1106 = vsel %vm1105, %v1103, %v1104
    %v1107 = vrot.slane %v1101, 6
    %v1108 = vsel %vm1045, %v1107, %v1106
    %vm1109 = vcmask 1046534
    %v1110 = vsel %vm1109, %v1107, %v1108
    %v1111 = vrot.slane %v1102, 5
    %v1112 = vsel %vm1048, %v1111, %v1110
    %vm1113 = vcmask 1047559
    %v1114 = vsel %vm1113, %v1111, %v1112
    %1116 = vst [vmem:[#allocation2] sm:$0xff] %v1114
    %v1117 = vrot.slane %v1085, 7
    %v1118 = vsel %vm1042, %v1117, %v1083
    %v1119 = vrot.slane %v1087, 6
    %v1120 = vsel %vm1045, %v1119, %v1118
    %v1121 = vrot.slane %v1089, 5
    %v1122 = vsel %vm1048, %v1121, %v1120
    %v1123 = vrot.slane %v1086, 7
    %v1124 = vsel %vm1042, %v1123, %v1084
    %v1125 = vrot.slane %v1088, 6
    %v1126 = vsel %vm1045, %v1125, %v1124
    %v1127 = vrot.slane %v1090, 5
    %v1128 = vsel %vm1048, %v1127, %v1126
    %1131 = vxpose.xlu0.b32.start [1/16] %v1122, 128
    %1132 = vxpose.xlu0.b32.cont [2/16] 0.0, 128
    %1133 = vxpose.xlu0.b32.cont [3/16] 0.0, 128
    %1134 = vxpose.xlu0.b32.cont [4/16] 0.0, 128
    %1135 = vxpose.xlu0.b32.cont [5/16] 0.0, 128
    %1136 = vxpose.xlu0.b32.cont [6/16] 0.0, 128
    %1137 = vxpose.xlu0.b32.cont [7/16] 0.0, 128
    %1138 = vxpose.xlu0.b32.cont [8/16] 0.0, 128
    %1139 = vxpose.xlu0.b32.cont [9/16] 0.0, 128
    %1140 = vxpose.xlu0.b32.cont [10/16] 0.0, 128
    %1141 = vxpose.xlu0.b32.cont [11/16] 0.0, 128
    %1142 = vxpose.xlu0.b32.cont [12/16] 0.0, 128
    %1143 = vxpose.xlu0.b32.cont [13/16] 0.0, 128
    %1144 = vxpose.xlu0.b32.cont [14/16] 0.0, 128
    %1145 = vxpose.xlu0.b32.cont [15/16] 0.0, 128
    %1146 = vxpose.xlu0.b32.end [16/16] 0.0, 128
    %v1147 = vpop.trf.xlu0
    %v1148 = vpop.trf.xlu0
    %v1149 = vpop.trf.xlu0
    %v1150 = vpop.trf.xlu0
    %v1151 = vpop.trf.xlu0
    %v1152 = vpop.trf.xlu0
    %v1153 = vpop.trf.xlu0
    %v1154 = vpop.trf.xlu0
    %v1155 = vpop.trf.xlu0
    %v1156 = vpop.trf.xlu0
    %v1157 = vpop.trf.xlu0
    %v1158 = vpop.trf.xlu0
    %v1159 = vpop.trf.xlu0
    %v1160 = vpop.trf.xlu0
    %v1161 = vpop.trf.xlu0
    %v1162 = vpop.trf.xlu0
    %1163 = vxpose.xlu0.b32.start [1/16] %v1128, 128
    %1164 = vxpose.xlu0.b32.cont [2/16] 0.0, 128
    %1165 = vxpose.xlu0.b32.cont [3/16] 0.0, 128
    %1166 = vxpose.xlu0.b32.cont [4/16] 0.0, 128
    %1167 = vxpose.xlu0.b32.cont [5/16] 0.0, 128
    %1168 = vxpose.xlu0.b32.cont [6/16] 0.0, 128
    %1169 = vxpose.xlu0.b32.cont [7/16] 0.0, 128
    %1170 = vxpose.xlu0.b32.cont [8/16] 0.0, 128
    %1171 = vxpose.xlu0.b32.cont [9/16] 0.0, 128
    %1172 = vxpose.xlu0.b32.cont [10/16] 0.0, 128
    %1173 = vxpose.xlu0.b32.cont [11/16] 0.0, 128
    %1174 = vxpose.xlu0.b32.cont [12/16] 0.0, 128
    %1175 = vxpose.xlu0.b32.cont [13/16] 0.0, 128
    %1176 = vxpose.xlu0.b32.cont [14/16] 0.0, 128
    %1177 = vxpose.xlu0.b32.cont [15/16] 0.0, 128
    %1178 = vxpose.xlu0.b32.end [16/16] 0.0, 128
    %v1179 = vpop.trf.xlu0
    %v1180 = vpop.trf.xlu0
    %v1181 = vpop.trf.xlu0
    %v1182 = vpop.trf.xlu0
    %v1183 = vpop.trf.xlu0
    %v1184 = vpop.trf.xlu0
    %v1185 = vpop.trf.xlu0
    %v1186 = vpop.trf.xlu0
    %v1187 = vpop.trf.xlu0
    %v1188 = vpop.trf.xlu0
    %v1189 = vpop.trf.xlu0
    %v1190 = vpop.trf.xlu0
    %v1191 = vpop.trf.xlu0
    %v1192 = vpop.trf.xlu0
    %v1193 = vpop.trf.xlu0
    %v1194 = vpop.trf.xlu0
    %1196 = vset.pattern.permute.xlu0 0
    %1197 = vperm.xlu0 %1196, %v1147
    %v1198 = vpop.permute.xlu0 %1197
    %1201 = vset.pattern.permute.xlu0 0
    %1202 = vperm.xlu0 %1201, %v1148
    %v1203 = vpop.permute.xlu0 %1202
    %1206 = vset.pattern.permute.xlu0 0
    %1207 = vperm.xlu0 %1206, %v1149
    %v1208 = vpop.permute.xlu0 %1207
    %1211 = vset.pattern.permute.xlu0 0
    %1212 = vperm.xlu0 %1211, %v1150
    %v1213 = vpop.permute.xlu0 %1212
    %1216 = vset.pattern.permute.xlu0 0
    %1217 = vperm.xlu0 %1216, %v1151
    %v1218 = vpop.permute.xlu0 %1217
    %1221 = vset.pattern.permute.xlu0 0
    %1222 = vperm.xlu0 %1221, %v1152
    %v1223 = vpop.permute.xlu0 %1222
    %1226 = vset.pattern.permute.xlu0 0
    %1227 = vperm.xlu0 %1226, %v1153
    %v1228 = vpop.permute.xlu0 %1227
    %1231 = vset.pattern.permute.xlu0 0
    %1232 = vperm.xlu0 %1231, %v1154
    %v1233 = vpop.permute.xlu0 %1232
    %1236 = vset.pattern.permute.xlu0 0
    %1237 = vperm.xlu0 %1236, %v1155
    %v1238 = vpop.permute.xlu0 %1237
    %1241 = vset.pattern.permute.xlu0 0
    %1242 = vperm.xlu0 %1241, %v1156
    %v1243 = vpop.permute.xlu0 %1242
    %1246 = vset.pattern.permute.xlu0 0
    %1247 = vperm.xlu0 %1246, %v1157
    %v1248 = vpop.permute.xlu0 %1247
    %1251 = vset.pattern.permute.xlu0 0
    %1252 = vperm.xlu0 %1251, %v1158
    %v1253 = vpop.permute.xlu0 %1252
    %1256 = vset.pattern.permute.xlu0 0
    %1257 = vperm.xlu0 %1256, %v1159
    %v1258 = vpop.permute.xlu0 %1257
    %1261 = vset.pattern.permute.xlu0 0
    %1262 = vperm.xlu0 %1261, %v1160
    %v1263 = vpop.permute.xlu0 %1262
    %1266 = vset.pattern.permute.xlu0 0
    %1267 = vperm.xlu0 %1266, %v1161
    %v1268 = vpop.permute.xlu0 %1267
    %1271 = vset.pattern.permute.xlu0 0
    %1272 = vperm.xlu0 %1271, %v1162
    %v1273 = vpop.permute.xlu0 %1272
    %1276 = vset.pattern.permute.xlu0 0
    %1277 = vperm.xlu0 %1276, %v1179
    %v1278 = vpop.permute.xlu0 %1277
    %1281 = vset.pattern.permute.xlu0 0
    %1282 = vperm.xlu0 %1281, %v1180
    %v1283 = vpop.permute.xlu0 %1282
    %1286 = vset.pattern.permute.xlu0 0
    %1287 = vperm.xlu0 %1286, %v1181
    %v1288 = vpop.permute.xlu0 %1287
    %1291 = vset.pattern.permute.xlu0 0
    %1292 = vperm.xlu0 %1291, %v1182
    %v1293 = vpop.permute.xlu0 %1292
    %1296 = vset.pattern.permute.xlu0 0
    %1297 = vperm.xlu0 %1296, %v1183
    %v1298 = vpop.permute.xlu0 %1297
    %1301 = vset.pattern.permute.xlu0 0
    %1302 = vperm.xlu0 %1301, %v1184
    %v1303 = vpop.permute.xlu0 %1302
    %1306 = vset.pattern.permute.xlu0 0
    %1307 = vperm.xlu0 %1306, %v1185
    %v1308 = vpop.permute.xlu0 %1307
    %1311 = vset.pattern.permute.xlu0 0
    %1312 = vperm.xlu0 %1311, %v1186
    %v1313 = vpop.permute.xlu0 %1312
    %1316 = vset.pattern.permute.xlu0 0
    %1317 = vperm.xlu0 %1316, %v1187
    %v1318 = vpop.permute.xlu0 %1317
    %1321 = vset.pattern.permute.xlu0 0
    %1322 = vperm.xlu0 %1321, %v1188
    %v1323 = vpop.permute.xlu0 %1322
    %1326 = vset.pattern.permute.xlu0 0
    %1327 = vperm.xlu0 %1326, %v1189
    %v1328 = vpop.permute.xlu0 %1327
    %1331 = vset.pattern.permute.xlu0 0
    %1332 = vperm.xlu0 %1331, %v1190
    %v1333 = vpop.permute.xlu0 %1332
    %1336 = vset.pattern.permute.xlu0 0
    %1337 = vperm.xlu0 %1336, %v1191
    %v1338 = vpop.permute.xlu0 %1337
    %1341 = vset.pattern.permute.xlu0 0
    %1342 = vperm.xlu0 %1341, %v1192
    %v1343 = vpop.permute.xlu0 %1342
    %1346 = vset.pattern.permute.xlu0 0
    %1347 = vperm.xlu0 %1346, %v1193
    %v1348 = vpop.permute.xlu0 %1347
    %1351 = vset.pattern.permute.xlu0 0
    %1352 = vperm.xlu0 %1351, %v1194
    %v1353 = vpop.permute.xlu0 %1352
    %v1355 = vmul.f32 %v1198, %v17
    %v1356 = vmul.f32 %v1203, %v18
    %v1357 = vmul.f32 %v1208, %v19
    %v1358 = vmul.f32 %v1213, %v20
    %v1359 = vmul.f32 %v1218, %v21
    %v1360 = vmul.f32 %v1223, %v22
    %v1361 = vmul.f32 %v1228, %v23
    %v1362 = vmul.f32 %v1233, %v24
    %v1363 = vmul.f32 %v1238, %v25
    %v1364 = vmul.f32 %v1243, %v26
    %v1365 = vmul.f32 %v1248, %v27
    %v1366 = vmul.f32 %v1253, %v28
    %v1367 = vmul.f32 %v1258, %v29
    %v1368 = vmul.f32 %v1263, %v30
    %v1369 = vmul.f32 %v1268, %v31
    %v1370 = vmul.f32 %v1273, %v32
    %v1371 = vmul.f32 %v1278, %v33
    %v1372 = vmul.f32 %v1283, %v34
    %v1373 = vmul.f32 %v1288, %v35
    %v1374 = vmul.f32 %v1293, %v36
    %v1375 = vmul.f32 %v1298, %v37
    %v1376 = vmul.f32 %v1303, %v38
    %v1377 = vmul.f32 %v1308, %v39
    %v1378 = vmul.f32 %v1313, %v40
    %v1379 = vmul.f32 %v1318, %v41
    %v1380 = vmul.f32 %v1323, %v42
    %v1381 = vmul.f32 %v1328, %v43
    %v1382 = vmul.f32 %v1333, %v44
    %v1383 = vmul.f32 %v1338, %v45
    %v1384 = vmul.f32 %v1343, %v46
    %v1385 = vmul.f32 %v1348, %v47
    %v1386 = vmul.f32 %v1353, %v48
    %1387 = vset.pattern.permute.xlu0 1
    %1388 = vperm.xlu0 %1387, %v1147
    %v1389 = vpop.permute.xlu0 %1388
    %1391 = vset.pattern.permute.xlu0 1
    %1392 = vperm.xlu0 %1391, %v1148
    %v1393 = vpop.permute.xlu0 %1392
    %1395 = vset.pattern.permute.xlu0 1
    %1396 = vperm.xlu0 %1395, %v1149
    %v1397 = vpop.permute.xlu0 %1396
    %1399 = vset.pattern.permute.xlu0 1
    %1400 = vperm.xlu0 %1399, %v1150
    %v1401 = vpop.permute.xlu0 %1400
    %1403 = vset.pattern.permute.xlu0 1
    %1404 = vperm.xlu0 %1403, %v1151
    %v1405 = vpop.permute.xlu0 %1404
    %1407 = vset.pattern.permute.xlu0 1
    %1408 = vperm.xlu0 %1407, %v1152
    %v1409 = vpop.permute.xlu0 %1408
    %1411 = vset.pattern.permute.xlu0 1
    %1412 = vperm.xlu0 %1411, %v1153
    %v1413 = vpop.permute.xlu0 %1412
    %1415 = vset.pattern.permute.xlu0 1
    %1416 = vperm.xlu0 %1415, %v1154
    %v1417 = vpop.permute.xlu0 %1416
    %1419 = vset.pattern.permute.xlu0 1
    %1420 = vperm.xlu0 %1419, %v1155
    %v1421 = vpop.permute.xlu0 %1420
    %1423 = vset.pattern.permute.xlu0 1
    %1424 = vperm.xlu0 %1423, %v1156
    %v1425 = vpop.permute.xlu0 %1424
    %1427 = vset.pattern.permute.xlu0 1
    %1428 = vperm.xlu0 %1427, %v1157
    %v1429 = vpop.permute.xlu0 %1428
    %1431 = vset.pattern.permute.xlu0 1
    %1432 = vperm.xlu0 %1431, %v1158
    %v1433 = vpop.permute.xlu0 %1432
    %1435 = vset.pattern.permute.xlu0 1
    %1436 = vperm.xlu0 %1435, %v1159
    %v1437 = vpop.permute.xlu0 %1436
    %1439 = vset.pattern.permute.xlu0 1
    %1440 = vperm.xlu0 %1439, %v1160
    %v1441 = vpop.permute.xlu0 %1440
    %1443 = vset.pattern.permute.xlu0 1
    %1444 = vperm.xlu0 %1443, %v1161
    %v1445 = vpop.permute.xlu0 %1444
    %1447 = vset.pattern.permute.xlu0 1
    %1448 = vperm.xlu0 %1447, %v1162
    %v1449 = vpop.permute.xlu0 %1448
    %1451 = vset.pattern.permute.xlu0 1
    %1452 = vperm.xlu0 %1451, %v1179
    %v1453 = vpop.permute.xlu0 %1452
    %1455 = vset.pattern.permute.xlu0 1
    %1456 = vperm.xlu0 %1455, %v1180
    %v1457 = vpop.permute.xlu0 %1456
    %1459 = vset.pattern.permute.xlu0 1
    %1460 = vperm.xlu0 %1459, %v1181
    %v1461 = vpop.permute.xlu0 %1460
    %1463 = vset.pattern.permute.xlu0 1
    %1464 = vperm.xlu0 %1463, %v1182
    %v1465 = vpop.permute.xlu0 %1464
    %1467 = vset.pattern.permute.xlu0 1
    %1468 = vperm.xlu0 %1467, %v1183
    %v1469 = vpop.permute.xlu0 %1468
    %1471 = vset.pattern.permute.xlu0 1
    %1472 = vperm.xlu0 %1471, %v1184
    %v1473 = vpop.permute.xlu0 %1472
    %1475 = vset.pattern.permute.xlu0 1
    %1476 = vperm.xlu0 %1475, %v1185
    %v1477 = vpop.permute.xlu0 %1476
    %1479 = vset.pattern.permute.xlu0 1
    %1480 = vperm.xlu0 %1479, %v1186
    %v1481 = vpop.permute.xlu0 %1480
    %1483 = vset.pattern.permute.xlu0 1
    %1484 = vperm.xlu0 %1483, %v1187
    %v1485 = vpop.permute.xlu0 %1484
    %1487 = vset.pattern.permute.xlu0 1
    %1488 = vperm.xlu0 %1487, %v1188
    %v1489 = vpop.permute.xlu0 %1488
    %1491 = vset.pattern.permute.xlu0 1
    %1492 = vperm.xlu0 %1491, %v1189
    %v1493 = vpop.permute.xlu0 %1492
    %1495 = vset.pattern.permute.xlu0 1
    %1496 = vperm.xlu0 %1495, %v1190
    %v1497 = vpop.permute.xlu0 %1496
    %1499 = vset.pattern.permute.xlu0 1
    %1500 = vperm.xlu0 %1499, %v1191
    %v1501 = vpop.permute.xlu0 %1500
    %1503 = vset.pattern.permute.xlu0 1
    %1504 = vperm.xlu0 %1503, %v1192
    %v1505 = vpop.permute.xlu0 %1504
    %1507 = vset.pattern.permute.xlu0 1
    %1508 = vperm.xlu0 %1507, %v1193
    %v1509 = vpop.permute.xlu0 %1508
    %1511 = vset.pattern.permute.xlu0 1
    %1512 = vperm.xlu0 %1511, %v1194
    %v1513 = vpop.permute.xlu0 %1512
    %v1515 = vmul.f32 %v1389, %v49
    %v1516 = vmul.f32 %v1393, %v50
    %v1517 = vmul.f32 %v1397, %v51
    %v1518 = vmul.f32 %v1401, %v52
    %v1519 = vmul.f32 %v1405, %v53
    %v1520 = vmul.f32 %v1409, %v54
    %v1521 = vmul.f32 %v1413, %v55
    %v1522 = vmul.f32 %v1417, %v56
    %v1523 = vmul.f32 %v1421, %v57
    %v1524 = vmul.f32 %v1425, %v58
    %v1525 = vmul.f32 %v1429, %v59
    %v1526 = vmul.f32 %v1433, %v60
    %v1527 = vmul.f32 %v1437, %v61
    %v1528 = vmul.f32 %v1441, %v62
    %v1529 = vmul.f32 %v1445, %v63
    %v1530 = vmul.f32 %v1449, %v64
    %v1531 = vmul.f32 %v1453, %v65
    %v1532 = vmul.f32 %v1457, %v66
    %v1533 = vmul.f32 %v1461, %v67
    %v1534 = vmul.f32 %v1465, %v68
    %v1535 = vmul.f32 %v1469, %v69
    %v1536 = vmul.f32 %v1473, %v70
    %v1537 = vmul.f32 %v1477, %v71
    %v1538 = vmul.f32 %v1481, %v72
    %v1539 = vmul.f32 %v1485, %v73
    %v1540 = vmul.f32 %v1489, %v74
    %v1541 = vmul.f32 %v1493, %v75
    %v1542 = vmul.f32 %v1497, %v76
    %v1543 = vmul.f32 %v1501, %v77
    %v1544 = vmul.f32 %v1505, %v78
    %v1545 = vmul.f32 %v1509, %v79
    %v1546 = vmul.f32 %v1513, %v80
    %v1547 = vadd.f32 %v1355, %v1515
    %v1548 = vadd.f32 %v1356, %v1516
    %v1549 = vadd.f32 %v1357, %v1517
    %v1550 = vadd.f32 %v1358, %v1518
    %v1551 = vadd.f32 %v1359, %v1519
    %v1552 = vadd.f32 %v1360, %v1520
    %v1553 = vadd.f32 %v1361, %v1521
    %v1554 = vadd.f32 %v1362, %v1522
    %v1555 = vadd.f32 %v1363, %v1523
    %v1556 = vadd.f32 %v1364, %v1524
    %v1557 = vadd.f32 %v1365, %v1525
    %v1558 = vadd.f32 %v1366, %v1526
    %v1559 = vadd.f32 %v1367, %v1527
    %v1560 = vadd.f32 %v1368, %v1528
    %v1561 = vadd.f32 %v1369, %v1529
    %v1562 = vadd.f32 %v1370, %v1530
    %v1563 = vadd.f32 %v1371, %v1531
    %v1564 = vadd.f32 %v1372, %v1532
    %v1565 = vadd.f32 %v1373, %v1533
    %v1566 = vadd.f32 %v1374, %v1534
    %v1567 = vadd.f32 %v1375, %v1535
    %v1568 = vadd.f32 %v1376, %v1536
    %v1569 = vadd.f32 %v1377, %v1537
    %v1570 = vadd.f32 %v1378, %v1538
    %v1571 = vadd.f32 %v1379, %v1539
    %v1572 = vadd.f32 %v1380, %v1540
    %v1573 = vadd.f32 %v1381, %v1541
    %v1574 = vadd.f32 %v1382, %v1542
    %v1575 = vadd.f32 %v1383, %v1543
    %v1576 = vadd.f32 %v1384, %v1544
    %v1577 = vadd.f32 %v1385, %v1545
    %v1578 = vadd.f32 %v1386, %v1546
    %1579 = vset.pattern.permute.xlu0 2
    %1580 = vperm.xlu0 %1579, %v1147
    %v1581 = vpop.permute.xlu0 %1580
    %1583 = vset.pattern.permute.xlu0 2
    %1584 = vperm.xlu0 %1583, %v1148
    %v1585 = vpop.permute.xlu0 %1584
    %1587 = vset.pattern.permute.xlu0 2
    %1588 = vperm.xlu0 %1587, %v1149
    %v1589 = vpop.permute.xlu0 %1588
    %1591 = vset.pattern.permute.xlu0 2
    %1592 = vperm.xlu0 %1591, %v1150
    %v1593 = vpop.permute.xlu0 %1592
    %1595 = vset.pattern.permute.xlu0 2
    %1596 = vperm.xlu0 %1595, %v1151
    %v1597 = vpop.permute.xlu0 %1596
    %1599 = vset.pattern.permute.xlu0 2
    %1600 = vperm.xlu0 %1599, %v1152
    %v1601 = vpop.permute.xlu0 %1600
    %1603 = vset.pattern.permute.xlu0 2
    %1604 = vperm.xlu0 %1603, %v1153
    %v1605 = vpop.permute.xlu0 %1604
    %1607 = vset.pattern.permute.xlu0 2
    %1608 = vperm.xlu0 %1607, %v1154
    %v1609 = vpop.permute.xlu0 %1608
    %1611 = vset.pattern.permute.xlu0 2
    %1612 = vperm.xlu0 %1611, %v1155
    %v1613 = vpop.permute.xlu0 %1612
    %1615 = vset.pattern.permute.xlu0 2
    %1616 = vperm.xlu0 %1615, %v1156
    %v1617 = vpop.permute.xlu0 %1616
    %1619 = vset.pattern.permute.xlu0 2
    %1620 = vperm.xlu0 %1619, %v1157
    %v1621 = vpop.permute.xlu0 %1620
    %1623 = vset.pattern.permute.xlu0 2
    %1624 = vperm.xlu0 %1623, %v1158
    %v1625 = vpop.permute.xlu0 %1624
    %1627 = vset.pattern.permute.xlu0 2
    %1628 = vperm.xlu0 %1627, %v1159
    %v1629 = vpop.permute.xlu0 %1628
    %1631 = vset.pattern.permute.xlu0 2
    %1632 = vperm.xlu0 %1631, %v1160
    %v1633 = vpop.permute.xlu0 %1632
    %1635 = vset.pattern.permute.xlu0 2
    %1636 = vperm.xlu0 %1635, %v1161
    %v1637 = vpop.permute.xlu0 %1636
    %1639 = vset.pattern.permute.xlu0 2
    %1640 = vperm.xlu0 %1639, %v1162
    %v1641 = vpop.permute.xlu0 %1640
    %1643 = vset.pattern.permute.xlu0 2
    %1644 = vperm.xlu0 %1643, %v1179
    %v1645 = vpop.permute.xlu0 %1644
    %1647 = vset.pattern.permute.xlu0 2
    %1648 = vperm.xlu0 %1647, %v1180
    %v1649 = vpop.permute.xlu0 %1648
    %1651 = vset.pattern.permute.xlu0 2
    %1652 = vperm.xlu0 %1651, %v1181
    %v1653 = vpop.permute.xlu0 %1652
    %1655 = vset.pattern.permute.xlu0 2
    %1656 = vperm.xlu0 %1655, %v1182
    %v1657 = vpop.permute.xlu0 %1656
    %1659 = vset.pattern.permute.xlu0 2
    %1660 = vperm.xlu0 %1659, %v1183
    %v1661 = vpop.permute.xlu0 %1660
    %1663 = vset.pattern.permute.xlu0 2
    %1664 = vperm.xlu0 %1663, %v1184
    %v1665 = vpop.permute.xlu0 %1664
    %1667 = vset.pattern.permute.xlu0 2
    %1668 = vperm.xlu0 %1667, %v1185
    %v1669 = vpop.permute.xlu0 %1668
    %1671 = vset.pattern.permute.xlu0 2
    %1672 = vperm.xlu0 %1671, %v1186
    %v1673 = vpop.permute.xlu0 %1672
    %1675 = vset.pattern.permute.xlu0 2
    %1676 = vperm.xlu0 %1675, %v1187
    %v1677 = vpop.permute.xlu0 %1676
    %1679 = vset.pattern.permute.xlu0 2
    %1680 = vperm.xlu0 %1679, %v1188
    %v1681 = vpop.permute.xlu0 %1680
    %1683 = vset.pattern.permute.xlu0 2
    %1684 = vperm.xlu0 %1683, %v1189
    %v1685 = vpop.permute.xlu0 %1684
    %1687 = vset.pattern.permute.xlu0 2
    %1688 = vperm.xlu0 %1687, %v1190
    %v1689 = vpop.permute.xlu0 %1688
    %1691 = vset.pattern.permute.xlu0 2
    %1692 = vperm.xlu0 %1691, %v1191
    %v1693 = vpop.permute.xlu0 %1692
    %1695 = vset.pattern.permute.xlu0 2
    %1696 = vperm.xlu0 %1695, %v1192
    %v1697 = vpop.permute.xlu0 %1696
    %1699 = vset.pattern.permute.xlu0 2
    %1700 = vperm.xlu0 %1699, %v1193
    %v1701 = vpop.permute.xlu0 %1700
    %1703 = vset.pattern.permute.xlu0 2
    %1704 = vperm.xlu0 %1703, %v1194
    %v1705 = vpop.permute.xlu0 %1704
    %v1707 = vmul.f32 %v1581, %v81
    %v1708 = vmul.f32 %v1585, %v82
    %v1709 = vmul.f32 %v1589, %v83
    %v1710 = vmul.f32 %v1593, %v84
    %v1711 = vmul.f32 %v1597, %v85
    %v1712 = vmul.f32 %v1601, %v86
    %v1713 = vmul.f32 %v1605, %v87
    %v1714 = vmul.f32 %v1609, %v88
    %v1715 = vmul.f32 %v1613, %v89
    %v1716 = vmul.f32 %v1617, %v90
    %v1717 = vmul.f32 %v1621, %v91
    %v1718 = vmul.f32 %v1625, %v92
    %v1719 = vmul.f32 %v1629, %v93
    %v1720 = vmul.f32 %v1633, %v94
    %v1721 = vmul.f32 %v1637, %v95
    %v1722 = vmul.f32 %v1641, %v96
    %v1723 = vmul.f32 %v1645, %v97
    %v1724 = vmul.f32 %v1649, %v98
    %v1725 = vmul.f32 %v1653, %v99
    %v1726 = vmul.f32 %v1657, %v100
    %v1727 = vmul.f32 %v1661, %v101
    %v1728 = vmul.f32 %v1665, %v102
    %v1729 = vmul.f32 %v1669, %v103
    %v1730 = vmul.f32 %v1673, %v104
    %v1731 = vmul.f32 %v1677, %v105
    %v1732 = vmul.f32 %v1681, %v106
    %v1733 = vmul.f32 %v1685, %v107
    %v1734 = vmul.f32 %v1689, %v108
    %v1735 = vmul.f32 %v1693, %v109
    %v1736 = vmul.f32 %v1697, %v110
    %v1737 = vmul.f32 %v1701, %v111
    %v1738 = vmul.f32 %v1705, %v112
    %v1739 = vadd.f32 %v1547, %v1707
    %v1740 = vadd.f32 %v1548, %v1708
    %v1741 = vadd.f32 %v1549, %v1709
    %v1742 = vadd.f32 %v1550, %v1710
    %v1743 = vadd.f32 %v1551, %v1711
    %v1744 = vadd.f32 %v1552, %v1712
    %v1745 = vadd.f32 %v1553, %v1713
    %v1746 = vadd.f32 %v1554, %v1714
    %v1747 = vadd.f32 %v1555, %v1715
    %v1748 = vadd.f32 %v1556, %v1716
    %v1749 = vadd.f32 %v1557, %v1717
    %v1750 = vadd.f32 %v1558, %v1718
    %v1751 = vadd.f32 %v1559, %v1719
    %v1752 = vadd.f32 %v1560, %v1720
    %v1753 = vadd.f32 %v1561, %v1721
    %v1754 = vadd.f32 %v1562, %v1722
    %v1755 = vadd.f32 %v1563, %v1723
    %v1756 = vadd.f32 %v1564, %v1724
    %v1757 = vadd.f32 %v1565, %v1725
    %v1758 = vadd.f32 %v1566, %v1726
    %v1759 = vadd.f32 %v1567, %v1727
    %v1760 = vadd.f32 %v1568, %v1728
    %v1761 = vadd.f32 %v1569, %v1729
    %v1762 = vadd.f32 %v1570, %v1730
    %v1763 = vadd.f32 %v1571, %v1731
    %v1764 = vadd.f32 %v1572, %v1732
    %v1765 = vadd.f32 %v1573, %v1733
    %v1766 = vadd.f32 %v1574, %v1734
    %v1767 = vadd.f32 %v1575, %v1735
    %v1768 = vadd.f32 %v1576, %v1736
    %v1769 = vadd.f32 %v1577, %v1737
    %v1770 = vadd.f32 %v1578, %v1738
    %1771 = vset.pattern.permute.xlu0 3
    %1772 = vperm.xlu0 %1771, %v1147
    %v1773 = vpop.permute.xlu0 %1772
    %1775 = vset.pattern.permute.xlu0 3
    %1776 = vperm.xlu0 %1775, %v1148
    %v1777 = vpop.permute.xlu0 %1776
    %1779 = vset.pattern.permute.xlu0 3
    %1780 = vperm.xlu0 %1779, %v1149
    %v1781 = vpop.permute.xlu0 %1780
    %1783 = vset.pattern.permute.xlu0 3
    %1784 = vperm.xlu0 %1783, %v1150
    %v1785 = vpop.permute.xlu0 %1784
    %1787 = vset.pattern.permute.xlu0 3
    %1788 = vperm.xlu0 %1787, %v1151
    %v1789 = vpop.permute.xlu0 %1788
    %1791 = vset.pattern.permute.xlu0 3
    %1792 = vperm.xlu0 %1791, %v1152
    %v1793 = vpop.permute.xlu0 %1792
    %1795 = vset.pattern.permute.xlu0 3
    %1796 = vperm.xlu0 %1795, %v1153
    %v1797 = vpop.permute.xlu0 %1796
    %1799 = vset.pattern.permute.xlu0 3
    %1800 = vperm.xlu0 %1799, %v1154
    %v1801 = vpop.permute.xlu0 %1800
    %1803 = vset.pattern.permute.xlu0 3
    %1804 = vperm.xlu0 %1803, %v1155
    %v1805 = vpop.permute.xlu0 %1804
    %1807 = vset.pattern.permute.xlu0 3
    %1808 = vperm.xlu0 %1807, %v1156
    %v1809 = vpop.permute.xlu0 %1808
    %1811 = vset.pattern.permute.xlu0 3
    %1812 = vperm.xlu0 %1811, %v1157
    %v1813 = vpop.permute.xlu0 %1812
    %1815 = vset.pattern.permute.xlu0 3
    %1816 = vperm.xlu0 %1815, %v1158
    %v1817 = vpop.permute.xlu0 %1816
    %1819 = vset.pattern.permute.xlu0 3
    %1820 = vperm.xlu0 %1819, %v1159
    %v1821 = vpop.permute.xlu0 %1820
    %1823 = vset.pattern.permute.xlu0 3
    %1824 = vperm.xlu0 %1823, %v1160
    %v1825 = vpop.permute.xlu0 %1824
    %1827 = vset.pattern.permute.xlu0 3
    %1828 = vperm.xlu0 %1827, %v1161
    %v1829 = vpop.permute.xlu0 %1828
    %1831 = vset.pattern.permute.xlu0 3
    %1832 = vperm.xlu0 %1831, %v1162
    %v1833 = vpop.permute.xlu0 %1832
    %1835 = vset.pattern.permute.xlu0 3
    %1836 = vperm.xlu0 %1835, %v1179
    %v1837 = vpop.permute.xlu0 %1836
    %1839 = vset.pattern.permute.xlu0 3
    %1840 = vperm.xlu0 %1839, %v1180
    %v1841 = vpop.permute.xlu0 %1840
    %1843 = vset.pattern.permute.xlu0 3
    %1844 = vperm.xlu0 %1843, %v1181
    %v1845 = vpop.permute.xlu0 %1844
    %1847 = vset.pattern.permute.xlu0 3
    %1848 = vperm.xlu0 %1847, %v1182
    %v1849 = vpop.permute.xlu0 %1848
    %1851 = vset.pattern.permute.xlu0 3
    %1852 = vperm.xlu0 %1851, %v1183
    %v1853 = vpop.permute.xlu0 %1852
    %1855 = vset.pattern.permute.xlu0 3
    %1856 = vperm.xlu0 %1855, %v1184
    %v1857 = vpop.permute.xlu0 %1856
    %1859 = vset.pattern.permute.xlu0 3
    %1860 = vperm.xlu0 %1859, %v1185
    %v1861 = vpop.permute.xlu0 %1860
    %1863 = vset.pattern.permute.xlu0 3
    %1864 = vperm.xlu0 %1863, %v1186
    %v1865 = vpop.permute.xlu0 %1864
    %1867 = vset.pattern.permute.xlu0 3
    %1868 = vperm.xlu0 %1867, %v1187
    %v1869 = vpop.permute.xlu0 %1868
    %1871 = vset.pattern.permute.xlu0 3
    %1872 = vperm.xlu0 %1871, %v1188
    %v1873 = vpop.permute.xlu0 %1872
    %1875 = vset.pattern.permute.xlu0 3
    %1876 = vperm.xlu0 %1875, %v1189
    %v1877 = vpop.permute.xlu0 %1876
    %1879 = vset.pattern.permute.xlu0 3
    %1880 = vperm.xlu0 %1879, %v1190
    %v1881 = vpop.permute.xlu0 %1880
    %1883 = vset.pattern.permute.xlu0 3
    %1884 = vperm.xlu0 %1883, %v1191
    %v1885 = vpop.permute.xlu0 %1884
    %1887 = vset.pattern.permute.xlu0 3
    %1888 = vperm.xlu0 %1887, %v1192
    %v1889 = vpop.permute.xlu0 %1888
    %1891 = vset.pattern.permute.xlu0 3
    %1892 = vperm.xlu0 %1891, %v1193
    %v1893 = vpop.permute.xlu0 %1892
    %1895 = vset.pattern.permute.xlu0 3
    %1896 = vperm.xlu0 %1895, %v1194
    %v1897 = vpop.permute.xlu0 %1896
    %v1899 = vmul.f32 %v1773, %v113
    %v1900 = vmul.f32 %v1777, %v114
    %v1901 = vmul.f32 %v1781, %v115
    %v1902 = vmul.f32 %v1785, %v116
    %v1903 = vmul.f32 %v1789, %v117
    %v1904 = vmul.f32 %v1793, %v118
    %v1905 = vmul.f32 %v1797, %v119
    %v1906 = vmul.f32 %v1801, %v120
    %v1907 = vmul.f32 %v1805, %v121
    %v1908 = vmul.f32 %v1809, %v122
    %v1909 = vmul.f32 %v1813, %v123
    %v1910 = vmul.f32 %v1817, %v124
    %v1911 = vmul.f32 %v1821, %v125
    %v1912 = vmul.f32 %v1825, %v126
    %v1913 = vmul.f32 %v1829, %v127
    %v1914 = vmul.f32 %v1833, %v128
    %v1915 = vmul.f32 %v1837, %v129
    %v1916 = vmul.f32 %v1841, %v130
    %v1917 = vmul.f32 %v1845, %v131
    %v1918 = vmul.f32 %v1849, %v132
    %v1919 = vmul.f32 %v1853, %v133
    %v1920 = vmul.f32 %v1857, %v134
    %v1921 = vmul.f32 %v1861, %v135
    %v1922 = vmul.f32 %v1865, %v136
    %v1923 = vmul.f32 %v1869, %v137
    %v1924 = vmul.f32 %v1873, %v138
    %v1925 = vmul.f32 %v1877, %v139
    %v1926 = vmul.f32 %v1881, %v140
    %v1927 = vmul.f32 %v1885, %v141
    %v1928 = vmul.f32 %v1889, %v142
    %v1929 = vmul.f32 %v1893, %v143
    %v1930 = vmul.f32 %v1897, %v144
    %v1931 = vadd.f32 %v1739, %v1899
    %v1932 = vadd.f32 %v1740, %v1900
    %v1933 = vadd.f32 %v1741, %v1901
    %v1934 = vadd.f32 %v1742, %v1902
    %v1935 = vadd.f32 %v1743, %v1903
    %v1936 = vadd.f32 %v1744, %v1904
    %v1937 = vadd.f32 %v1745, %v1905
    %v1938 = vadd.f32 %v1746, %v1906
    %v1939 = vadd.f32 %v1747, %v1907
    %v1940 = vadd.f32 %v1748, %v1908
    %v1941 = vadd.f32 %v1749, %v1909
    %v1942 = vadd.f32 %v1750, %v1910
    %v1943 = vadd.f32 %v1751, %v1911
    %v1944 = vadd.f32 %v1752, %v1912
    %v1945 = vadd.f32 %v1753, %v1913
    %v1946 = vadd.f32 %v1754, %v1914
    %v1947 = vadd.f32 %v1755, %v1915
    %v1948 = vadd.f32 %v1756, %v1916
    %v1949 = vadd.f32 %v1757, %v1917
    %v1950 = vadd.f32 %v1758, %v1918
    %v1951 = vadd.f32 %v1759, %v1919
    %v1952 = vadd.f32 %v1760, %v1920
    %v1953 = vadd.f32 %v1761, %v1921
    %v1954 = vadd.f32 %v1762, %v1922
    %v1955 = vadd.f32 %v1763, %v1923
    %v1956 = vadd.f32 %v1764, %v1924
    %v1957 = vadd.f32 %v1765, %v1925
    %v1958 = vadd.f32 %v1766, %v1926
    %v1959 = vadd.f32 %v1767, %v1927
    %v1960 = vadd.f32 %v1768, %v1928
    %v1961 = vadd.f32 %v1769, %v1929
    %v1962 = vadd.f32 %v1770, %v1930
    %1963 = vst.msk [vmem:[%s3] sm:$0xff] %vm154, %v1931
    %1964 = vst.msk [vmem:[%s3 + $0x8] sm:$0xff] %vm154, %v1932
    %1965 = vst.msk [vmem:[%s3 + $0x10] sm:$0xff] %vm154, %v1933
    %1966 = vst.msk [vmem:[%s3 + $0x18] sm:$0xff] %vm154, %v1934
    %1967 = vst.msk [vmem:[%s3 + $0x20] sm:$0xff] %vm154, %v1935
    %1968 = vst.msk [vmem:[%s3 + $0x28] sm:$0xff] %vm154, %v1936
    %1969 = vst.msk [vmem:[%s3 + $0x30] sm:$0xff] %vm154, %v1937
    %1970 = vst.msk [vmem:[%s3 + $0x38] sm:$0xff] %vm154, %v1938
    %1971 = vst.msk [vmem:[%s3 + $0x40] sm:$0xff] %vm154, %v1939
    %1972 = vst.msk [vmem:[%s3 + $0x48] sm:$0xff] %vm154, %v1940
    %1973 = vst.msk [vmem:[%s3 + $0x50] sm:$0xff] %vm154, %v1941
    %1974 = vst.msk [vmem:[%s3 + $0x58] sm:$0xff] %vm154, %v1942
    %1975 = vst.msk [vmem:[%s3 + $0x60] sm:$0xff] %vm154, %v1943
    %1976 = vst.msk [vmem:[%s3 + $0x68] sm:$0xff] %vm154, %v1944
    %1977 = vst.msk [vmem:[%s3 + $0x70] sm:$0xff] %vm154, %v1945
    %1978 = vst.msk [vmem:[%s3 + $0x78] sm:$0xff] %vm154, %v1946
    %1979 = vst.msk [vmem:[%s3 + $0x80] sm:$0xff] %vm154, %v1947
    %1980 = vst.msk [vmem:[%s3 + $0x88] sm:$0xff] %vm154, %v1948
    %1981 = vst.msk [vmem:[%s3 + $0x90] sm:$0xff] %vm154, %v1949
    %1982 = vst.msk [vmem:[%s3 + $0x98] sm:$0xff] %vm154, %v1950
    %1983 = vst.msk [vmem:[%s3 + $0xa0] sm:$0xff] %vm154, %v1951
    %1984 = vst.msk [vmem:[%s3 + $0xa8] sm:$0xff] %vm154, %v1952
    %1985 = vst.msk [vmem:[%s3 + $0xb0] sm:$0xff] %vm154, %v1953
    %1986 = vst.msk [vmem:[%s3 + $0xb8] sm:$0xff] %vm154, %v1954
    %1987 = vst.msk [vmem:[%s3 + $0xc0] sm:$0xff] %vm154, %v1955
    %1988 = vst.msk [vmem:[%s3 + $0xc8] sm:$0xff] %vm154, %v1956
    %1989 = vst.msk [vmem:[%s3 + $0xd0] sm:$0xff] %vm154, %v1957
    %1990 = vst.msk [vmem:[%s3 + $0xd8] sm:$0xff] %vm154, %v1958
    %1991 = vst.msk [vmem:[%s3 + $0xe0] sm:$0xff] %vm154, %v1959
    %1992 = vst.msk [vmem:[%s3 + $0xe8] sm:$0xff] %vm154, %v1960
    %1993 = vst.msk [vmem:[%s3 + $0xf0] sm:$0xff] %vm154, %v1961
    %1994 = vst.msk [vmem:[%s3 + $0xf8] sm:$0xff] %vm154, %v1962
    // Predicated region
    $region14: #{semantic_attention_einsum.1} parent=1 // pred_check
      _
    $region15: #{semantic_attention_einsum.1} parent=1 // pred_check_branch
      %1996 = sbr.rel (0) target = $region17
    $region16: #{semantic_attention_einsum.1} parent=1 // pred_region
      _
    $region17: #{semantic_attention_einsum.1} parent=1 // pred_fallthru
      _
    // Predicated region
    $region18: #{semantic_attention_einsum.1} parent=1 // pred_check
      _
    $region19: #{semantic_attention_einsum.1} parent=1 // pred_check_branch
      %1998 = sbr.rel (0) target = $region21
    $region20: #{semantic_attention_einsum.1} parent=1 // pred_region
      %s2000 = ssub.s32 128, 128
      %2001 = vsyncadd [#allocation3], %s2000
      %s2003 = sshll.u32 [#allocation2], 4
      %s2004 = int_to_ptr.vmem [resolvable:$true] %s2003
      %2006 = dma.vmem_to_hbm [thread:$0]  %s2004, 128, %s4, [#allocation3]
    $region21: #{semantic_attention_einsum.1} parent=1 // pred_fallthru
      _
    // Predicated region
    $region22: #{semantic_attention_einsum.1} parent=1 // pred_check
      _
    $region23: #{semantic_attention_einsum.1} parent=1 // pred_check_branch
      %2008 = sbr.rel (0) target = $region25
    $region24: #{semantic_attention_einsum.1} parent=1 // pred_region
      _
    $region25: #{semantic_attention_einsum.1} parent=1 // pred_fallthru
      _
    // Predicated region
    $region26: #{semantic_attention_einsum.1} parent=1 // pred_check
      _
    $region27: #{semantic_attention_einsum.1} parent=1 // pred_check_branch
      %2010 = sbr.rel (0) target = $region29
    $region28: #{semantic_attention_einsum.1} parent=1 // pred_region
      %2011 = dma.done [#allocation3], 128
    $region29: #{semantic_attention_einsum.1} parent=1 // pred_fallthru
      _
    %2012 = vsyncpa [#allocation3], 1

</llo_original>
